<compile_context>
chip_gen: v7x
topology: tpu7x:2x2x1
jax: 0.10.0
libtpu: 0.0.40
codegen_flags: <defaults>
</compile_context>

<pallas_src>
import functools

import jax
import jax.numpy as jnp
from jax.experimental import pallas as pl
from jax.experimental.pallas import tpu as pltpu


# ----------------------------- Pallas kernel -----------------------------

def fused_encoder_kernel(x_ref,
                         w1_ref, b1_ref, g1_ref, be1_ref,
                         w2_ref, b2_ref, g2_ref, be2_ref,
                         o_ref, pad_ref,
                         *, kernel_size, dilations, max_pad,
                         eps=1e-8, matmul_dtype=jnp.float32):
    """Runs the full ResidualBlock_b stack for one batch tile.

    x_ref:   (TB, L, D)           batch tile of activations
    w*_ref:  (N, K*D, D)          im2col-reshaped conv weights, all layers
    b*/g*/be*_ref: (N, 1, D)      conv bias / LN gamma / LN beta, all layers
    pad_ref: (TB, max_pad+L, D)   reusable zero-left-padded activation scratch
    """
    TB, L, D = x_ref.shape
    K = kernel_size
    M = TB * L  # matmul rows per conv: the whole batch tile in one MXU push

    # Zero the causal left-pad rows ONCE per grid step; they are never written
    # again, so every conv of every layer reuses them.
    if max_pad > 0:
        pad_ref[:, :max_pad, :] = jnp.zeros((TB, max_pad, D), jnp.float32)

    def causal_conv(h2, w, b, dil):
        # h2: (M, D) activation.  Single im2col matmul per conv.
        pad = (K - 1) * dil
        pad_ref[:, max_pad:, :] = h2.reshape(TB, L, D)
        base = max_pad - pad
        # Statically drop taps whose causal shift >= L: they read only zeros.
        valid = [k for k in range(K) if (K - 1 - k) * dil < L]
        taps = [pad_ref[:, base + k * dil: base + k * dil + L, :].reshape(M, D)
                for k in valid]
        cols = taps[0] if len(taps) == 1 else jnp.concatenate(taps, axis=-1)
        w_sl = w[valid[0] * D:, :]                      # (len(valid)*D, D)
        out = jnp.dot(cols.astype(matmul_dtype), w_sl.astype(matmul_dtype),
                      preferred_element_type=jnp.float32)
        return out + b                                  # (M, D) + (1, D)

    def layer_norm(h2, g, b):
        mu = jnp.mean(h2, axis=-1, keepdims=True)
        var = jnp.mean((h2 - mu) ** 2, axis=-1, keepdims=True)
        return (h2 - mu) * jax.lax.rsqrt(var + eps) * g + b

    h = x_ref[...].astype(jnp.float32).reshape(M, D)    # (TB*L, D)

    # Static unroll over residual blocks; activations never leave VMEM.
    # NOTE: for much deeper stacks, this should become an "arbitrary" grid
    # axis that streams per-layer weights (keeps VMEM flat on v7x's 64 MiB).
    for layer, dil in enumerate(dilations):
        a = jnp.maximum(
            layer_norm(causal_conv(h, w1_ref[layer], b1_ref[layer], dil),
                       g1_ref[layer], be1_ref[layer]), 0.0)
        a2 = jnp.maximum(
            layer_norm(causal_conv(a, w2_ref[layer], b2_ref[layer], dil * 2),
                       g2_ref[layer], be2_ref[layer]), 0.0)
        h = a2 + h                                      # residual

    o_ref[...] = h.reshape(TB, L, D).astype(o_ref.dtype)


# ------------------------------- wrapper ----------------------------------

def _pick_batch_tile(B, L, D, max_pad, target_rows=512, budget_bytes=8 << 20):
    """Largest divisor of B giving >= target_rows matmul rows, VMEM-bounded."""
    bytes_per_elem = 4 * D * (max_pad + 8 * L)   # scratch + live f32 temps, rough
    tb = 1
    for cand in range(1, B + 1):
        if B % cand:
            continue
        if cand * bytes_per_elem > budget_bytes:
            break
        tb = cand
        if cand * L >= target_rows:
            break
    return tb


def user_encoder_nextitnet(x, all_params, kernel_size, dilations, *,
                           batch_tile=None, matmul_dtype=jnp.float32):
    """Sequential stack of ResidualBlock_b, fused into one pallas_call."""
    B, L, D = x.shape
    K = kernel_size

    # Stack per-layer parameters; conv weights reshaped to (K*D, D) for im2col.
    w1s = jnp.stack([p[0].reshape(K * D, D) for p in all_params])   # (N, K*D, D)
    b1s = jnp.stack([p[1].reshape(1, D) for p in all_params])       # (N, 1, D)
    g1s = jnp.stack([p[2].reshape(1, D) for p in all_params])
    be1s = jnp.stack([p[3].reshape(1, D) for p in all_params])
    w2s = jnp.stack([p[4].reshape(K * D, D) for p in all_params])
    b2s = jnp.stack([p[5].reshape(1, D) for p in all_params])
    g2s = jnp.stack([p[6].reshape(1, D) for p in all_params])
    be2s = jnp.stack([p[7].reshape(1, D) for p in all_params])

    max_pad = (K - 1) * 2 * max(dilations)   # largest causal left pad (conv2)
    TB = batch_tile or _pick_batch_tile(B, L, D, max_pad)
    assert B % TB == 0, "batch tile must divide batch"

    kern = functools.partial(fused_encoder_kernel, kernel_size=K,
                             dilations=tuple(dilations), max_pad=max_pad,
                             matmul_dtype=matmul_dtype)

    def const_spec(a):  # whole-array block, constant index -> fetched once
        return pl.BlockSpec(a.shape, lambda b, _n=a.ndim: (0,) * _n)

    return pl.pallas_call(
        kern,
        out_shape=jax.ShapeDtypeStruct((B, L, D), x.dtype),
        grid=(B // TB,),
        in_specs=[pl.BlockSpec((TB, L, D), lambda b: (b, 0, 0)),
                  const_spec(w1s), const_spec(b1s), const_spec(g1s), const_spec(be1s),
                  const_spec(w2s), const_spec(b2s), const_spec(g2s), const_spec(be2s)],
        out_specs=pl.BlockSpec((TB, L, D), lambda b: (b, 0, 0)),
        scratch_shapes=[pltpu.VMEM((TB, max_pad + L, D), jnp.float32)],
        compiler_params=pltpu.CompilerParams(dimension_semantics=("parallel",)),
    )(x, w1s, b1s, g1s, be1s, w2s, b2s, g2s, be2s)


# ------------------------- pure-JAX reference -----------------------------

def _ref_conv(inp, w, b, K, dil):
    B, L, D = inp.shape
    xp = jnp.pad(inp, ((0, 0), ((K - 1) * dil, 0), (0, 0)))
    out = jnp.zeros((B, L, D), jnp.float32)
    for k in range(K):
        out = out + jnp.einsum('bld,do->blo', xp[:, k * dil:k * dil + L, :], w[k])
    return out + b[0]


def _ref_ln(h, g, b, eps=1e-8):
    mu = jnp.mean(h, axis=-1, keepdims=True)
    var = jnp.mean((h - mu) ** 2, axis=-1, keepdims=True)
    return (h - mu) / jnp.sqrt(var + eps) * g[0] + b[0]


def reference(x, all_params, K, dilations):
    h = x
    for (w1, b1, g1, be1, w2, b2, g2, be2), dil in zip(all_params, dilations):
        a = jnp.maximum(_ref_ln(_ref_conv(h, w1, b1, K, dil), g1, be1), 0.0)
        a2 = jnp.maximum(_ref_ln(_ref_conv(a, w2, b2, K, dil * 2), g2, be2), 0.0)
        h = a2 + h
    return h


# ---------------------------------- main ----------------------------------

if __name__ == "__main__":
    # args.embedding_dim = 32, args.kernel_size = 3,
    # args.dilations = [1, 4], args.block_num = 2  ->  dilations = [1,4,1,4]
    B, L, D = 2, 16, 32
    kernel_size = 3
    block_num = 2
    dilations = [1, 4] * block_num

    key = jax.random.PRNGKey(0)
    key, xk = jax.random.split(key)
    x = jax.random.normal(xk, (B, L, D), jnp.float32)

    # Deterministic synthetic parameters (conv weights uniform, LN = ones/zeros,
    # matching PyTorch LayerNorm default init).  Conv weights are already in
    # (K, D_in, D_out) layout (see checkpoint note above).
    all_params = []
    scale = 1.0 / float(kernel_size * D) ** 0.5
    for i, _ in enumerate(dilations):
        ks = jax.random.split(jax.random.PRNGKey(100 + i), 4)
        w1 = jax.random.uniform(ks[0], (kernel_size, D, D), jnp.float32, -scale, scale)
        b1 = jax.random.uniform(ks[1], (1, D), jnp.float32, -scale, scale)
        w2 = jax.random.uniform(ks[2], (kernel_size, D, D), jnp.float32, -scale, scale)
        b2 = jax.random.uniform(ks[3], (1, D), jnp.float32, -scale, scale)
        g1 = jnp.ones((1, D), jnp.float32)
        be1 = jnp.zeros((1, D), jnp.float32)
        g2 = jnp.ones((1, D), jnp.float32)
        be2 = jnp.zeros((1, D), jnp.float32)
        all_params.append((w1, b1, g1, be1, w2, b2, g2, be2))

    out = user_encoder_nextitnet(x, all_params, kernel_size, dilations)
    out = jax.block_until_ready(out)

    ref = reference(x, all_params, kernel_size, dilations)
    assert out.shape == (B, L, D) and out.dtype == jnp.float32
    assert jnp.allclose(out, ref, atol=1e-4, rtol=1e-4), "mismatch vs reference"
    print("KERNEL_OK")
</pallas_src>

<mosaic_0001>
module attributes {stable_mosaic.version = 11 : i64} {
  func.func @fused_encoder_kernel(%arg0: i32, %arg1: memref<2x16x32xf32, #tpu.memory_space<vmem>>, %arg2: memref<4x96x32xf32, #tpu.memory_space<vmem>>, %arg3: memref<4x1x32xf32, #tpu.memory_space<vmem>>, %arg4: memref<4x1x32xf32, #tpu.memory_space<vmem>>, %arg5: memref<4x1x32xf32, #tpu.memory_space<vmem>>, %arg6: memref<4x96x32xf32, #tpu.memory_space<vmem>>, %arg7: memref<4x1x32xf32, #tpu.memory_space<vmem>>, %arg8: memref<4x1x32xf32, #tpu.memory_space<vmem>>, %arg9: memref<4x1x32xf32, #tpu.memory_space<vmem>>, %arg10: memref<2x16x32xf32, #tpu.memory_space<vmem>>, %arg11: memref<2x32x32xf32, #tpu.memory_space<vmem>>) attributes {dimension_semantics = [#tpu.dimension_semantics<parallel>], iteration_bounds = array<i64: 1>, scalar_prefetch = 0 : i64, scratch_operands = 1 : i64, tpu.core_type = #tpu.core_type<tc>, window_params = [{transform_indices = @transform_0, window_bounds = array<i64: 2, 16, 32>}, {pipeline_mode = #tpu.pipeline_mode<synchronous>, transform_indices = @transform_1, window_bounds = array<i64: 4, 96, 32>}, {pipeline_mode = #tpu.pipeline_mode<synchronous>, transform_indices = @transform_2, window_bounds = array<i64: 4, 1, 32>}, {pipeline_mode = #tpu.pipeline_mode<synchronous>, transform_indices = @transform_3, window_bounds = array<i64: 4, 1, 32>}, {pipeline_mode = #tpu.pipeline_mode<synchronous>, transform_indices = @transform_4, window_bounds = array<i64: 4, 1, 32>}, {pipeline_mode = #tpu.pipeline_mode<synchronous>, transform_indices = @transform_5, window_bounds = array<i64: 4, 96, 32>}, {pipeline_mode = #tpu.pipeline_mode<synchronous>, transform_indices = @transform_6, window_bounds = array<i64: 4, 1, 32>}, {pipeline_mode = #tpu.pipeline_mode<synchronous>, transform_indices = @transform_7, window_bounds = array<i64: 4, 1, 32>}, {pipeline_mode = #tpu.pipeline_mode<synchronous>, transform_indices = @transform_8, window_bounds = array<i64: 4, 1, 32>}, {transform_indices = @transform_9, window_bounds = array<i64: 2, 16, 32>}]} {
    %cst = arith.constant 0.000000e+00 : f32
    %0 = vector.broadcast %cst : f32 to vector<2x16x32xf32>
    %c0 = arith.constant 0 : index
    %c0_0 = arith.constant 0 : index
    %c0_1 = arith.constant 0 : index
    %1 = vector.load %arg11[%c0, %c0_0, %c0_1] : memref<2x32x32xf32, #tpu.memory_space<vmem>>, vector<2x16x32xf32>
    tpu.vector_store %arg11[%c0, %c0_0, %c0_1], %0 {strides = array<i32>} : memref<2x32x32xf32, #tpu.memory_space<vmem>>, vector<2x16x32xf32>,
    %c0_2 = arith.constant 0 : index
    %c0_3 = arith.constant 0 : index
    %c0_4 = arith.constant 0 : index
    %2 = vector.load %arg1[%c0_2, %c0_3, %c0_4] : memref<2x16x32xf32, #tpu.memory_space<vmem>>, vector<2x16x32xf32>
    %3 = vector.shape_cast %2 : vector<2x16x32xf32> to vector<32x32xf32>
    %c0_5 = arith.constant 0 : index
    %c0_6 = arith.constant 0 : index
    %c0_7 = arith.constant 0 : index
    %4 = vector.load %arg2[%c0_5, %c0_6, %c0_7] : memref<4x96x32xf32, #tpu.memory_space<vmem>>, vector<1x96x32xf32>
    %5 = vector.shape_cast %4 : vector<1x96x32xf32> to vector<96x32xf32>
    %c0_8 = arith.constant 0 : index
    %c0_9 = arith.constant 0 : index
    %c0_10 = arith.constant 0 : index
    %6 = vector.load %arg3[%c0_8, %c0_9, %c0_10] : memref<4x1x32xf32, #tpu.memory_space<vmem>>, vector<1x1x32xf32>
    %7 = vector.shape_cast %6 : vector<1x1x32xf32> to vector<1x32xf32>
    %8 = vector.shape_cast %3 : vector<32x32xf32> to vector<2x16x32xf32>
    %c0_11 = arith.constant 0 : index
    %c16 = arith.constant 16 : index
    %c0_12 = arith.constant 0 : index
    %9 = vector.load %arg11[%c0_11, %c16, %c0_12] : memref<2x32x32xf32, #tpu.memory_space<vmem>>, vector<2x16x32xf32>
    tpu.vector_store %arg11[%c0_11, %c16, %c0_12], %8 {strides = array<i32>} : memref<2x32x32xf32, #tpu.memory_space<vmem>>, vector<2x16x32xf32>,
    %c0_13 = arith.constant 0 : index
    %c14 = arith.constant 14 : index
    %c0_14 = arith.constant 0 : index
    %10 = vector.load %arg11[%c0_13, %c14, %c0_14] : memref<2x32x32xf32, #tpu.memory_space<vmem>>, vector<2x16x32xf32>
    %11 = vector.shape_cast %10 : vector<2x16x32xf32> to vector<32x32xf32>
    %c0_15 = arith.constant 0 : index
    %c15 = arith.constant 15 : index
    %c0_16 = arith.constant 0 : index
    %12 = vector.load %arg11[%c0_15, %c15, %c0_16] : memref<2x32x32xf32, #tpu.memory_space<vmem>>, vector<2x16x32xf32>
    %13 = vector.shape_cast %12 : vector<2x16x32xf32> to vector<32x32xf32>
    %c0_17 = arith.constant 0 : index
    %c16_18 = arith.constant 16 : index
    %c0_19 = arith.constant 0 : index
    %14 = vector.load %arg11[%c0_17, %c16_18, %c0_19] : memref<2x32x32xf32, #tpu.memory_space<vmem>>, vector<2x16x32xf32>
    %15 = vector.shape_cast %14 : vector<2x16x32xf32> to vector<32x32xf32>
    %16 = tpu.concatenate %11, %13, %15 in 1 : vector<32x32xf32>, vector<32x32xf32>, vector<32x32xf32> -> vector<32x96xf32>
    %cst_20 = arith.constant dense<0.000000e+00> : vector<32x32xf32>
    %17 = tpu.matmul %16, %5, %cst_20 {dimension_numbers = #tpu.dot_dimension_numbers<[1], [0], [0], [1], [0, 0, 1, 1], [], []>} : vector<32x96xf32>, vector<96x32xf32>, vector<32x32xf32> -> vector<32x32xf32>
    %18 = vector.broadcast %7 : vector<1x32xf32> to vector<32x32xf32>
    %19 = arith.addf %17, %18 : vector<32x32xf32>
    %c0_21 = arith.constant 0 : index
    %c0_22 = arith.constant 0 : index
    %c0_23 = arith.constant 0 : index
    %20 = vector.load %arg4[%c0_21, %c0_22, %c0_23] : memref<4x1x32xf32, #tpu.memory_space<vmem>>, vector<1x1x32xf32>
    %21 = vector.shape_cast %20 : vector<1x1x32xf32> to vector<1x32xf32>
    %c0_24 = arith.constant 0 : index
    %c0_25 = arith.constant 0 : index
    %c0_26 = arith.constant 0 : index
    %22 = vector.load %arg5[%c0_24, %c0_25, %c0_26] : memref<4x1x32xf32, #tpu.memory_space<vmem>>, vector<1x1x32xf32>
    %23 = vector.shape_cast %22 : vector<1x1x32xf32> to vector<1x32xf32>
    %cst_27 = arith.constant dense<0.000000e+00> : vector<32xf32>
    %24 = vector.multi_reduction <add>, %19, %cst_27 [1] : vector<32x32xf32> to vector<32xf32>
    %25 = vector.shape_cast %24 : vector<32xf32> to vector<32x1xf32>
    %cst_28 = arith.constant 3.200000e+01 : f32
    %26 = vector.broadcast %cst_28 : f32 to vector<32x1xf32>
    %27 = arith.divf %25, %26 : vector<32x1xf32>
    %28 = vector.broadcast %27 : vector<32x1xf32> to vector<32x32xf32>
    %29 = arith.subf %19, %28 : vector<32x32xf32>
    %30 = arith.mulf %29, %29 : vector<32x32xf32>
    %cst_29 = arith.constant dense<0.000000e+00> : vector<32xf32>
    %31 = vector.multi_reduction <add>, %30, %cst_29 [1] : vector<32x32xf32> to vector<32xf32>
    %32 = vector.shape_cast %31 : vector<32xf32> to vector<32x1xf32>
    %cst_30 = arith.constant 3.200000e+01 : f32
    %33 = vector.broadcast %cst_30 : f32 to vector<32x1xf32>
    %34 = arith.divf %32, %33 : vector<32x1xf32>
    %35 = vector.broadcast %27 : vector<32x1xf32> to vector<32x32xf32>
    %36 = arith.subf %19, %35 : vector<32x32xf32>
    %cst_31 = arith.constant 9.99999993E-9 : f32
    %37 = vector.broadcast %cst_31 : f32 to vector<32x1xf32>
    %38 = arith.addf %34, %37 : vector<32x1xf32>
    %39 = math.rsqrt %38 : vector<32x1xf32>
    %40 = vector.broadcast %39 : vector<32x1xf32> to vector<32x32xf32>
    %41 = arith.mulf %36, %40 : vector<32x32xf32>
    %42 = vector.broadcast %21 : vector<1x32xf32> to vector<32x32xf32>
    %43 = arith.mulf %41, %42 : vector<32x32xf32>
    %44 = vector.broadcast %23 : vector<1x32xf32> to vector<32x32xf32>
    %45 = arith.addf %43, %44 : vector<32x32xf32>
    %cst_32 = arith.constant 0.000000e+00 : f32
    %46 = vector.broadcast %cst_32 : f32 to vector<32x32xf32>
    %47 = arith.maximumf %45, %46 : vector<32x32xf32>
    %c0_33 = arith.constant 0 : index
    %c0_34 = arith.constant 0 : index
    %c0_35 = arith.constant 0 : index
    %48 = vector.load %arg6[%c0_33, %c0_34, %c0_35] : memref<4x96x32xf32, #tpu.memory_space<vmem>>, vector<1x96x32xf32>
    %49 = vector.shape_cast %48 : vector<1x96x32xf32> to vector<96x32xf32>
    %c0_36 = arith.constant 0 : index
    %c0_37 = arith.constant 0 : index
    %c0_38 = arith.constant 0 : index
    %50 = vector.load %arg7[%c0_36, %c0_37, %c0_38] : memref<4x1x32xf32, #tpu.memory_space<vmem>>, vector<1x1x32xf32>
    %51 = vector.shape_cast %50 : vector<1x1x32xf32> to vector<1x32xf32>
    %52 = vector.shape_cast %47 : vector<32x32xf32> to vector<2x16x32xf32>
    %c0_39 = arith.constant 0 : index
    %c16_40 = arith.constant 16 : index
    %c0_41 = arith.constant 0 : index
    %53 = vector.load %arg11[%c0_39, %c16_40, %c0_41] : memref<2x32x32xf32, #tpu.memory_space<vmem>>, vector<2x16x32xf32>
    tpu.vector_store %arg11[%c0_39, %c16_40, %c0_41], %52 {strides = array<i32>} : memref<2x32x32xf32, #tpu.memory_space<vmem>>, vector<2x16x32xf32>,
    %c0_42 = arith.constant 0 : index
    %c12 = arith.constant 12 : index
    %c0_43 = arith.constant 0 : index
    %54 = vector.load %arg11[%c0_42, %c12, %c0_43] : memref<2x32x32xf32, #tpu.memory_space<vmem>>, vector<2x16x32xf32>
    %55 = vector.shape_cast %54 : vector<2x16x32xf32> to vector<32x32xf32>
    %c0_44 = arith.constant 0 : index
    %c14_45 = arith.constant 14 : index
    %c0_46 = arith.constant 0 : index
    %56 = vector.load %arg11[%c0_44, %c14_45, %c0_46] : memref<2x32x32xf32, #tpu.memory_space<vmem>>, vector<2x16x32xf32>
    %57 = vector.shape_cast %56 : vector<2x16x32xf32> to vector<32x32xf32>
    %c0_47 = arith.constant 0 : index
    %c16_48 = arith.constant 16 : index
    %c0_49 = arith.constant 0 : index
    %58 = vector.load %arg11[%c0_47, %c16_48, %c0_49] : memref<2x32x32xf32, #tpu.memory_space<vmem>>, vector<2x16x32xf32>
    %59 = vector.shape_cast %58 : vector<2x16x32xf32> to vector<32x32xf32>
    %60 = tpu.concatenate %55, %57, %59 in 1 : vector<32x32xf32>, vector<32x32xf32>, vector<32x32xf32> -> vector<32x96xf32>
    %cst_50 = arith.constant dense<0.000000e+00> : vector<32x32xf32>
    %61 = tpu.matmul %60, %49, %cst_50 {dimension_numbers = #tpu.dot_dimension_numbers<[1], [0], [0], [1], [0, 0, 1, 1], [], []>} : vector<32x96xf32>, vector<96x32xf32>, vector<32x32xf32> -> vector<32x32xf32>
    %62 = vector.broadcast %51 : vector<1x32xf32> to vector<32x32xf32>
    %63 = arith.addf %61, %62 : vector<32x32xf32>
    %c0_51 = arith.constant 0 : index
    %c0_52 = arith.constant 0 : index
    %c0_53 = arith.constant 0 : index
    %64 = vector.load %arg8[%c0_51, %c0_52, %c0_53] : memref<4x1x32xf32, #tpu.memory_space<vmem>>, vector<1x1x32xf32>
    %65 = vector.shape_cast %64 : vector<1x1x32xf32> to vector<1x32xf32>
    %c0_54 = arith.constant 0 : index
    %c0_55 = arith.constant 0 : index
    %c0_56 = arith.constant 0 : index
    %66 = vector.load %arg9[%c0_54, %c0_55, %c0_56] : memref<4x1x32xf32, #tpu.memory_space<vmem>>, vector<1x1x32xf32>
    %67 = vector.shape_cast %66 : vector<1x1x32xf32> to vector<1x32xf32>
    %cst_57 = arith.constant dense<0.000000e+00> : vector<32xf32>
    %68 = vector.multi_reduction <add>, %63, %cst_57 [1] : vector<32x32xf32> to vector<32xf32>
    %69 = vector.shape_cast %68 : vector<32xf32> to vector<32x1xf32>
    %cst_58 = arith.constant 3.200000e+01 : f32
    %70 = vector.broadcast %cst_58 : f32 to vector<32x1xf32>
    %71 = arith.divf %69, %70 : vector<32x1xf32>
    %72 = vector.broadcast %71 : vector<32x1xf32> to vector<32x32xf32>
    %73 = arith.subf %63, %72 : vector<32x32xf32>
    %74 = arith.mulf %73, %73 : vector<32x32xf32>
    %cst_59 = arith.constant dense<0.000000e+00> : vector<32xf32>
    %75 = vector.multi_reduction <add>, %74, %cst_59 [1] : vector<32x32xf32> to vector<32xf32>
    %76 = vector.shape_cast %75 : vector<32xf32> to vector<32x1xf32>
    %cst_60 = arith.constant 3.200000e+01 : f32
    %77 = vector.broadcast %cst_60 : f32 to vector<32x1xf32>
    %78 = arith.divf %76, %77 : vector<32x1xf32>
    %79 = vector.broadcast %71 : vector<32x1xf32> to vector<32x32xf32>
    %80 = arith.subf %63, %79 : vector<32x32xf32>
    %cst_61 = arith.constant 9.99999993E-9 : f32
    %81 = vector.broadcast %cst_61 : f32 to vector<32x1xf32>
    %82 = arith.addf %78, %81 : vector<32x1xf32>
    %83 = math.rsqrt %82 : vector<32x1xf32>
    %84 = vector.broadcast %83 : vector<32x1xf32> to vector<32x32xf32>
    %85 = arith.mulf %80, %84 : vector<32x32xf32>
    %86 = vector.broadcast %65 : vector<1x32xf32> to vector<32x32xf32>
    %87 = arith.mulf %85, %86 : vector<32x32xf32>
    %88 = vector.broadcast %67 : vector<1x32xf32> to vector<32x32xf32>
    %89 = arith.addf %87, %88 : vector<32x32xf32>
    %cst_62 = arith.constant 0.000000e+00 : f32
    %90 = vector.broadcast %cst_62 : f32 to vector<32x32xf32>
    %91 = arith.maximumf %89, %90 : vector<32x32xf32>
    %92 = arith.addf %91, %3 : vector<32x32xf32>
    %c1 = arith.constant 1 : index
    %c0_63 = arith.constant 0 : index
    %c0_64 = arith.constant 0 : index
    %93 = vector.load %arg2[%c1, %c0_63, %c0_64] : memref<4x96x32xf32, #tpu.memory_space<vmem>>, vector<1x96x32xf32>
    %94 = vector.shape_cast %93 : vector<1x96x32xf32> to vector<96x32xf32>
    %c1_65 = arith.constant 1 : index
    %c0_66 = arith.constant 0 : index
    %c0_67 = arith.constant 0 : index
    %95 = vector.load %arg3[%c1_65, %c0_66, %c0_67] : memref<4x1x32xf32, #tpu.memory_space<vmem>>, vector<1x1x32xf32>
    %96 = vector.shape_cast %95 : vector<1x1x32xf32> to vector<1x32xf32>
    %97 = vector.shape_cast %92 : vector<32x32xf32> to vector<2x16x32xf32>
    %c0_68 = arith.constant 0 : index
    %c16_69 = arith.constant 16 : index
    %c0_70 = arith.constant 0 : index
    %98 = vector.load %arg11[%c0_68, %c16_69, %c0_70] : memref<2x32x32xf32, #tpu.memory_space<vmem>>, vector<2x16x32xf32>
    tpu.vector_store %arg11[%c0_68, %c16_69, %c0_70], %97 {strides = array<i32>} : memref<2x32x32xf32, #tpu.memory_space<vmem>>, vector<2x16x32xf32>,
    %c0_71 = arith.constant 0 : index
    %c8 = arith.constant 8 : index
    %c0_72 = arith.constant 0 : index
    %99 = vector.load %arg11[%c0_71, %c8, %c0_72] : memref<2x32x32xf32, #tpu.memory_space<vmem>>, vector<2x16x32xf32>
    %100 = vector.shape_cast %99 : vector<2x16x32xf32> to vector<32x32xf32>
    %c0_73 = arith.constant 0 : index
    %c12_74 = arith.constant 12 : index
    %c0_75 = arith.constant 0 : index
    %101 = vector.load %arg11[%c0_73, %c12_74, %c0_75] : memref<2x32x32xf32, #tpu.memory_space<vmem>>, vector<2x16x32xf32>
    %102 = vector.shape_cast %101 : vector<2x16x32xf32> to vector<32x32xf32>
    %c0_76 = arith.constant 0 : index
    %c16_77 = arith.constant 16 : index
    %c0_78 = arith.constant 0 : index
    %103 = vector.load %arg11[%c0_76, %c16_77, %c0_78] : memref<2x32x32xf32, #tpu.memory_space<vmem>>, vector<2x16x32xf32>
    %104 = vector.shape_cast %103 : vector<2x16x32xf32> to vector<32x32xf32>
    %105 = tpu.concatenate %100, %102, %104 in 1 : vector<32x32xf32>, vector<32x32xf32>, vector<32x32xf32> -> vector<32x96xf32>
    %cst_79 = arith.constant dense<0.000000e+00> : vector<32x32xf32>
    %106 = tpu.matmul %105, %94, %cst_79 {dimension_numbers = #tpu.dot_dimension_numbers<[1], [0], [0], [1], [0, 0, 1, 1], [], []>} : vector<32x96xf32>, vector<96x32xf32>, vector<32x32xf32> -> vector<32x32xf32>
    %107 = vector.broadcast %96 : vector<1x32xf32> to vector<32x32xf32>
    %108 = arith.addf %106, %107 : vector<32x32xf32>
    %c1_80 = arith.constant 1 : index
    %c0_81 = arith.constant 0 : index
    %c0_82 = arith.constant 0 : index
    %109 = vector.load %arg4[%c1_80, %c0_81, %c0_82] : memref<4x1x32xf32, #tpu.memory_space<vmem>>, vector<1x1x32xf32>
    %110 = vector.shape_cast %109 : vector<1x1x32xf32> to vector<1x32xf32>
    %c1_83 = arith.constant 1 : index
    %c0_84 = arith.constant 0 : index
    %c0_85 = arith.constant 0 : index
    %111 = vector.load %arg5[%c1_83, %c0_84, %c0_85] : memref<4x1x32xf32, #tpu.memory_space<vmem>>, vector<1x1x32xf32>
    %112 = vector.shape_cast %111 : vector<1x1x32xf32> to vector<1x32xf32>
    %cst_86 = arith.constant dense<0.000000e+00> : vector<32xf32>
    %113 = vector.multi_reduction <add>, %108, %cst_86 [1] : vector<32x32xf32> to vector<32xf32>
    %114 = vector.shape_cast %113 : vector<32xf32> to vector<32x1xf32>
    %cst_87 = arith.constant 3.200000e+01 : f32
    %115 = vector.broadcast %cst_87 : f32 to vector<32x1xf32>
    %116 = arith.divf %114, %115 : vector<32x1xf32>
    %117 = vector.broadcast %116 : vector<32x1xf32> to vector<32x32xf32>
    %118 = arith.subf %108, %117 : vector<32x32xf32>
    %119 = arith.mulf %118, %118 : vector<32x32xf32>
    %cst_88 = arith.constant dense<0.000000e+00> : vector<32xf32>
    %120 = vector.multi_reduction <add>, %119, %cst_88 [1] : vector<32x32xf32> to vector<32xf32>
    %121 = vector.shape_cast %120 : vector<32xf32> to vector<32x1xf32>
    %cst_89 = arith.constant 3.200000e+01 : f32
    %122 = vector.broadcast %cst_89 : f32 to vector<32x1xf32>
    %123 = arith.divf %121, %122 : vector<32x1xf32>
    %124 = vector.broadcast %116 : vector<32x1xf32> to vector<32x32xf32>
    %125 = arith.subf %108, %124 : vector<32x32xf32>
    %cst_90 = arith.constant 9.99999993E-9 : f32
    %126 = vector.broadcast %cst_90 : f32 to vector<32x1xf32>
    %127 = arith.addf %123, %126 : vector<32x1xf32>
    %128 = math.rsqrt %127 : vector<32x1xf32>
    %129 = vector.broadcast %128 : vector<32x1xf32> to vector<32x32xf32>
    %130 = arith.mulf %125, %129 : vector<32x32xf32>
    %131 = vector.broadcast %110 : vector<1x32xf32> to vector<32x32xf32>
    %132 = arith.mulf %130, %131 : vector<32x32xf32>
    %133 = vector.broadcast %112 : vector<1x32xf32> to vector<32x32xf32>
    %134 = arith.addf %132, %133 : vector<32x32xf32>
    %cst_91 = arith.constant 0.000000e+00 : f32
    %135 = vector.broadcast %cst_91 : f32 to vector<32x32xf32>
    %136 = arith.maximumf %134, %135 : vector<32x32xf32>
    %c1_92 = arith.constant 1 : index
    %c0_93 = arith.constant 0 : index
    %c0_94 = arith.constant 0 : index
    %137 = vector.load %arg6[%c1_92, %c0_93, %c0_94] : memref<4x96x32xf32, #tpu.memory_space<vmem>>, vector<1x96x32xf32>
    %138 = vector.shape_cast %137 : vector<1x96x32xf32> to vector<96x32xf32>
    %c1_95 = arith.constant 1 : index
    %c0_96 = arith.constant 0 : index
    %c0_97 = arith.constant 0 : index
    %139 = vector.load %arg7[%c1_95, %c0_96, %c0_97] : memref<4x1x32xf32, #tpu.memory_space<vmem>>, vector<1x1x32xf32>
    %140 = vector.shape_cast %139 : vector<1x1x32xf32> to vector<1x32xf32>
    %141 = vector.shape_cast %136 : vector<32x32xf32> to vector<2x16x32xf32>
    %c0_98 = arith.constant 0 : index
    %c16_99 = arith.constant 16 : index
    %c0_100 = arith.constant 0 : index
    %142 = vector.load %arg11[%c0_98, %c16_99, %c0_100] : memref<2x32x32xf32, #tpu.memory_space<vmem>>, vector<2x16x32xf32>
    tpu.vector_store %arg11[%c0_98, %c16_99, %c0_100], %141 {strides = array<i32>} : memref<2x32x32xf32, #tpu.memory_space<vmem>>, vector<2x16x32xf32>,
    %c0_101 = arith.constant 0 : index
    %c8_102 = arith.constant 8 : index
    %c0_103 = arith.constant 0 : index
    %143 = vector.load %arg11[%c0_101, %c8_102, %c0_103] : memref<2x32x32xf32, #tpu.memory_space<vmem>>, vector<2x16x32xf32>
    %144 = vector.shape_cast %143 : vector<2x16x32xf32> to vector<32x32xf32>
    %c0_104 = arith.constant 0 : index
    %c16_105 = arith.constant 16 : index
    %c0_106 = arith.constant 0 : index
    %145 = vector.load %arg11[%c0_104, %c16_105, %c0_106] : memref<2x32x32xf32, #tpu.memory_space<vmem>>, vector<2x16x32xf32>
    %146 = vector.shape_cast %145 : vector<2x16x32xf32> to vector<32x32xf32>
    %147 = tpu.concatenate %144, %146 in 1 : vector<32x32xf32>, vector<32x32xf32> -> vector<32x64xf32>
    %148 = vector.extract_strided_slice %138 {offsets = [32, 0], sizes = [64, 32], strides = [1, 1]} : vector<96x32xf32> to vector<64x32xf32>
    %cst_107 = arith.constant dense<0.000000e+00> : vector<32x32xf32>
    %149 = tpu.matmul %147, %148, %cst_107 {dimension_numbers = #tpu.dot_dimension_numbers<[1], [0], [0], [1], [0, 0, 1, 1], [], []>} : vector<32x64xf32>, vector<64x32xf32>, vector<32x32xf32> -> vector<32x32xf32>
    %150 = vector.broadcast %140 : vector<1x32xf32> to vector<32x32xf32>
    %151 = arith.addf %149, %150 : vector<32x32xf32>
    %c1_108 = arith.constant 1 : index
    %c0_109 = arith.constant 0 : index
    %c0_110 = arith.constant 0 : index
    %152 = vector.load %arg8[%c1_108, %c0_109, %c0_110] : memref<4x1x32xf32, #tpu.memory_space<vmem>>, vector<1x1x32xf32>
    %153 = vector.shape_cast %152 : vector<1x1x32xf32> to vector<1x32xf32>
    %c1_111 = arith.constant 1 : index
    %c0_112 = arith.constant 0 : index
    %c0_113 = arith.constant 0 : index
    %154 = vector.load %arg9[%c1_111, %c0_112, %c0_113] : memref<4x1x32xf32, #tpu.memory_space<vmem>>, vector<1x1x32xf32>
    %155 = vector.shape_cast %154 : vector<1x1x32xf32> to vector<1x32xf32>
    %cst_114 = arith.constant dense<0.000000e+00> : vector<32xf32>
    %156 = vector.multi_reduction <add>, %151, %cst_114 [1] : vector<32x32xf32> to vector<32xf32>
    %157 = vector.shape_cast %156 : vector<32xf32> to vector<32x1xf32>
    %cst_115 = arith.constant 3.200000e+01 : f32
    %158 = vector.broadcast %cst_115 : f32 to vector<32x1xf32>
    %159 = arith.divf %157, %158 : vector<32x1xf32>
    %160 = vector.broadcast %159 : vector<32x1xf32> to vector<32x32xf32>
    %161 = arith.subf %151, %160 : vector<32x32xf32>
    %162 = arith.mulf %161, %161 : vector<32x32xf32>
    %cst_116 = arith.constant dense<0.000000e+00> : vector<32xf32>
    %163 = vector.multi_reduction <add>, %162, %cst_116 [1] : vector<32x32xf32> to vector<32xf32>
    %164 = vector.shape_cast %163 : vector<32xf32> to vector<32x1xf32>
    %cst_117 = arith.constant 3.200000e+01 : f32
    %165 = vector.broadcast %cst_117 : f32 to vector<32x1xf32>
    %166 = arith.divf %164, %165 : vector<32x1xf32>
    %167 = vector.broadcast %159 : vector<32x1xf32> to vector<32x32xf32>
    %168 = arith.subf %151, %167 : vector<32x32xf32>
    %cst_118 = arith.constant 9.99999993E-9 : f32
    %169 = vector.broadcast %cst_118 : f32 to vector<32x1xf32>
    %170 = arith.addf %166, %169 : vector<32x1xf32>
    %171 = math.rsqrt %170 : vector<32x1xf32>
    %172 = vector.broadcast %171 : vector<32x1xf32> to vector<32x32xf32>
    %173 = arith.mulf %168, %172 : vector<32x32xf32>
    %174 = vector.broadcast %153 : vector<1x32xf32> to vector<32x32xf32>
    %175 = arith.mulf %173, %174 : vector<32x32xf32>
    %176 = vector.broadcast %155 : vector<1x32xf32> to vector<32x32xf32>
    %177 = arith.addf %175, %176 : vector<32x32xf32>
    %cst_119 = arith.constant 0.000000e+00 : f32
    %178 = vector.broadcast %cst_119 : f32 to vector<32x32xf32>
    %179 = arith.maximumf %177, %178 : vector<32x32xf32>
    %180 = arith.addf %179, %92 : vector<32x32xf32>
    %c2 = arith.constant 2 : index
    %c0_120 = arith.constant 0 : index
    %c0_121 = arith.constant 0 : index
    %181 = vector.load %arg2[%c2, %c0_120, %c0_121] : memref<4x96x32xf32, #tpu.memory_space<vmem>>, vector<1x96x32xf32>
    %182 = vector.shape_cast %181 : vector<1x96x32xf32> to vector<96x32xf32>
    %c2_122 = arith.constant 2 : index
    %c0_123 = arith.constant 0 : index
    %c0_124 = arith.constant 0 : index
    %183 = vector.load %arg3[%c2_122, %c0_123, %c0_124] : memref<4x1x32xf32, #tpu.memory_space<vmem>>, vector<1x1x32xf32>
    %184 = vector.shape_cast %183 : vector<1x1x32xf32> to vector<1x32xf32>
    %185 = vector.shape_cast %180 : vector<32x32xf32> to vector<2x16x32xf32>
    %c0_125 = arith.constant 0 : index
    %c16_126 = arith.constant 16 : index
    %c0_127 = arith.constant 0 : index
    %186 = vector.load %arg11[%c0_125, %c16_126, %c0_127] : memref<2x32x32xf32, #tpu.memory_space<vmem>>, vector<2x16x32xf32>
    tpu.vector_store %arg11[%c0_125, %c16_126, %c0_127], %185 {strides = array<i32>} : memref<2x32x32xf32, #tpu.memory_space<vmem>>, vector<2x16x32xf32>,
    %c0_128 = arith.constant 0 : index
    %c14_129 = arith.constant 14 : index
    %c0_130 = arith.constant 0 : index
    %187 = vector.load %arg11[%c0_128, %c14_129, %c0_130] : memref<2x32x32xf32, #tpu.memory_space<vmem>>, vector<2x16x32xf32>
    %188 = vector.shape_cast %187 : vector<2x16x32xf32> to vector<32x32xf32>
    %c0_131 = arith.constant 0 : index
    %c15_132 = arith.constant 15 : index
    %c0_133 = arith.constant 0 : index
    %189 = vector.load %arg11[%c0_131, %c15_132, %c0_133] : memref<2x32x32xf32, #tpu.memory_space<vmem>>, vector<2x16x32xf32>
    %190 = vector.shape_cast %189 : vector<2x16x32xf32> to vector<32x32xf32>
    %c0_134 = arith.constant 0 : index
    %c16_135 = arith.constant 16 : index
    %c0_136 = arith.constant 0 : index
    %191 = vector.load %arg11[%c0_134, %c16_135, %c0_136] : memref<2x32x32xf32, #tpu.memory_space<vmem>>, vector<2x16x32xf32>
    %192 = vector.shape_cast %191 : vector<2x16x32xf32> to vector<32x32xf32>
    %193 = tpu.concatenate %188, %190, %192 in 1 : vector<32x32xf32>, vector<32x32xf32>, vector<32x32xf32> -> vector<32x96xf32>
    %cst_137 = arith.constant dense<0.000000e+00> : vector<32x32xf32>
    %194 = tpu.matmul %193, %182, %cst_137 {dimension_numbers = #tpu.dot_dimension_numbers<[1], [0], [0], [1], [0, 0, 1, 1], [], []>} : vector<32x96xf32>, vector<96x32xf32>, vector<32x32xf32> -> vector<32x32xf32>
    %195 = vector.broadcast %184 : vector<1x32xf32> to vector<32x32xf32>
    %196 = arith.addf %194, %195 : vector<32x32xf32>
    %c2_138 = arith.constant 2 : index
    %c0_139 = arith.constant 0 : index
    %c0_140 = arith.constant 0 : index
    %197 = vector.load %arg4[%c2_138, %c0_139, %c0_140] : memref<4x1x32xf32, #tpu.memory_space<vmem>>, vector<1x1x32xf32>
    %198 = vector.shape_cast %197 : vector<1x1x32xf32> to vector<1x32xf32>
    %c2_141 = arith.constant 2 : index
    %c0_142 = arith.constant 0 : index
    %c0_143 = arith.constant 0 : index
    %199 = vector.load %arg5[%c2_141, %c0_142, %c0_143] : memref<4x1x32xf32, #tpu.memory_space<vmem>>, vector<1x1x32xf32>
    %200 = vector.shape_cast %199 : vector<1x1x32xf32> to vector<1x32xf32>
    %cst_144 = arith.constant dense<0.000000e+00> : vector<32xf32>
    %201 = vector.multi_reduction <add>, %196, %cst_144 [1] : vector<32x32xf32> to vector<32xf32>
    %202 = vector.shape_cast %201 : vector<32xf32> to vector<32x1xf32>
    %cst_145 = arith.constant 3.200000e+01 : f32
    %203 = vector.broadcast %cst_145 : f32 to vector<32x1xf32>
    %204 = arith.divf %202, %203 : vector<32x1xf32>
    %205 = vector.broadcast %204 : vector<32x1xf32> to vector<32x32xf32>
    %206 = arith.subf %196, %205 : vector<32x32xf32>
    %207 = arith.mulf %206, %206 : vector<32x32xf32>
    %cst_146 = arith.constant dense<0.000000e+00> : vector<32xf32>
    %208 = vector.multi_reduction <add>, %207, %cst_146 [1] : vector<32x32xf32> to vector<32xf32>
    %209 = vector.shape_cast %208 : vector<32xf32> to vector<32x1xf32>
    %cst_147 = arith.constant 3.200000e+01 : f32
    %210 = vector.broadcast %cst_147 : f32 to vector<32x1xf32>
    %211 = arith.divf %209, %210 : vector<32x1xf32>
    %212 = vector.broadcast %204 : vector<32x1xf32> to vector<32x32xf32>
    %213 = arith.subf %196, %212 : vector<32x32xf32>
    %cst_148 = arith.constant 9.99999993E-9 : f32
    %214 = vector.broadcast %cst_148 : f32 to vector<32x1xf32>
    %215 = arith.addf %211, %214 : vector<32x1xf32>
    %216 = math.rsqrt %215 : vector<32x1xf32>
    %217 = vector.broadcast %216 : vector<32x1xf32> to vector<32x32xf32>
    %218 = arith.mulf %213, %217 : vector<32x32xf32>
    %219 = vector.broadcast %198 : vector<1x32xf32> to vector<32x32xf32>
    %220 = arith.mulf %218, %219 : vector<32x32xf32>
    %221 = vector.broadcast %200 : vector<1x32xf32> to vector<32x32xf32>
    %222 = arith.addf %220, %221 : vector<32x32xf32>
    %cst_149 = arith.constant 0.000000e+00 : f32
    %223 = vector.broadcast %cst_149 : f32 to vector<32x32xf32>
    %224 = arith.maximumf %222, %223 : vector<32x32xf32>
    %c2_150 = arith.constant 2 : index
    %c0_151 = arith.constant 0 : index
    %c0_152 = arith.constant 0 : index
    %225 = vector.load %arg6[%c2_150, %c0_151, %c0_152] : memref<4x96x32xf32, #tpu.memory_space<vmem>>, vector<1x96x32xf32>
    %226 = vector.shape_cast %225 : vector<1x96x32xf32> to vector<96x32xf32>
    %c2_153 = arith.constant 2 : index
    %c0_154 = arith.constant 0 : index
    %c0_155 = arith.constant 0 : index
    %227 = vector.load %arg7[%c2_153, %c0_154, %c0_155] : memref<4x1x32xf32, #tpu.memory_space<vmem>>, vector<1x1x32xf32>
    %228 = vector.shape_cast %227 : vector<1x1x32xf32> to vector<1x32xf32>
    %229 = vector.shape_cast %224 : vector<32x32xf32> to vector<2x16x32xf32>
    %c0_156 = arith.constant 0 : index
    %c16_157 = arith.constant 16 : index
    %c0_158 = arith.constant 0 : index
    %230 = vector.load %arg11[%c0_156, %c16_157, %c0_158] : memref<2x32x32xf32, #tpu.memory_space<vmem>>, vector<2x16x32xf32>
    tpu.vector_store %arg11[%c0_156, %c16_157, %c0_158], %229 {strides = array<i32>} : memref<2x32x32xf32, #tpu.memory_space<vmem>>, vector<2x16x32xf32>,
    %c0_159 = arith.constant 0 : index
    %c12_160 = arith.constant 12 : index
    %c0_161 = arith.constant 0 : index
    %231 = vector.load %arg11[%c0_159, %c12_160, %c0_161] : memref<2x32x32xf32, #tpu.memory_space<vmem>>, vector<2x16x32xf32>
    %232 = vector.shape_cast %231 : vector<2x16x32xf32> to vector<32x32xf32>
    %c0_162 = arith.constant 0 : index
    %c14_163 = arith.constant 14 : index
    %c0_164 = arith.constant 0 : index
    %233 = vector.load %arg11[%c0_162, %c14_163, %c0_164] : memref<2x32x32xf32, #tpu.memory_space<vmem>>, vector<2x16x32xf32>
    %234 = vector.shape_cast %233 : vector<2x16x32xf32> to vector<32x32xf32>
    %c0_165 = arith.constant 0 : index
    %c16_166 = arith.constant 16 : index
    %c0_167 = arith.constant 0 : index
    %235 = vector.load %arg11[%c0_165, %c16_166, %c0_167] : memref<2x32x32xf32, #tpu.memory_space<vmem>>, vector<2x16x32xf32>
    %236 = vector.shape_cast %235 : vector<2x16x32xf32> to vector<32x32xf32>
    %237 = tpu.concatenate %232, %234, %236 in 1 : vector<32x32xf32>, vector<32x32xf32>, vector<32x32xf32> -> vector<32x96xf32>
    %cst_168 = arith.constant dense<0.000000e+00> : vector<32x32xf32>
    %238 = tpu.matmul %237, %226, %cst_168 {dimension_numbers = #tpu.dot_dimension_numbers<[1], [0], [0], [1], [0, 0, 1, 1], [], []>} : vector<32x96xf32>, vector<96x32xf32>, vector<32x32xf32> -> vector<32x32xf32>
    %239 = vector.broadcast %228 : vector<1x32xf32> to vector<32x32xf32>
    %240 = arith.addf %238, %239 : vector<32x32xf32>
    %c2_169 = arith.constant 2 : index
    %c0_170 = arith.constant 0 : index
    %c0_171 = arith.constant 0 : index
    %241 = vector.load %arg8[%c2_169, %c0_170, %c0_171] : memref<4x1x32xf32, #tpu.memory_space<vmem>>, vector<1x1x32xf32>
    %242 = vector.shape_cast %241 : vector<1x1x32xf32> to vector<1x32xf32>
    %c2_172 = arith.constant 2 : index
    %c0_173 = arith.constant 0 : index
    %c0_174 = arith.constant 0 : index
    %243 = vector.load %arg9[%c2_172, %c0_173, %c0_174] : memref<4x1x32xf32, #tpu.memory_space<vmem>>, vector<1x1x32xf32>
    %244 = vector.shape_cast %243 : vector<1x1x32xf32> to vector<1x32xf32>
    %cst_175 = arith.constant dense<0.000000e+00> : vector<32xf32>
    %245 = vector.multi_reduction <add>, %240, %cst_175 [1] : vector<32x32xf32> to vector<32xf32>
    %246 = vector.shape_cast %245 : vector<32xf32> to vector<32x1xf32>
    %cst_176 = arith.constant 3.200000e+01 : f32
    %247 = vector.broadcast %cst_176 : f32 to vector<32x1xf32>
    %248 = arith.divf %246, %247 : vector<32x1xf32>
    %249 = vector.broadcast %248 : vector<32x1xf32> to vector<32x32xf32>
    %250 = arith.subf %240, %249 : vector<32x32xf32>
    %251 = arith.mulf %250, %250 : vector<32x32xf32>
    %cst_177 = arith.constant dense<0.000000e+00> : vector<32xf32>
    %252 = vector.multi_reduction <add>, %251, %cst_177 [1] : vector<32x32xf32> to vector<32xf32>
    %253 = vector.shape_cast %252 : vector<32xf32> to vector<32x1xf32>
    %cst_178 = arith.constant 3.200000e+01 : f32
    %254 = vector.broadcast %cst_178 : f32 to vector<32x1xf32>
    %255 = arith.divf %253, %254 : vector<32x1xf32>
    %256 = vector.broadcast %248 : vector<32x1xf32> to vector<32x32xf32>
    %257 = arith.subf %240, %256 : vector<32x32xf32>
    %cst_179 = arith.constant 9.99999993E-9 : f32
    %258 = vector.broadcast %cst_179 : f32 to vector<32x1xf32>
    %259 = arith.addf %255, %258 : vector<32x1xf32>
    %260 = math.rsqrt %259 : vector<32x1xf32>
    %261 = vector.broadcast %260 : vector<32x1xf32> to vector<32x32xf32>
    %262 = arith.mulf %257, %261 : vector<32x32xf32>
    %263 = vector.broadcast %242 : vector<1x32xf32> to vector<32x32xf32>
    %264 = arith.mulf %262, %263 : vector<32x32xf32>
    %265 = vector.broadcast %244 : vector<1x32xf32> to vector<32x32xf32>
    %266 = arith.addf %264, %265 : vector<32x32xf32>
    %cst_180 = arith.constant 0.000000e+00 : f32
    %267 = vector.broadcast %cst_180 : f32 to vector<32x32xf32>
    %268 = arith.maximumf %266, %267 : vector<32x32xf32>
    %269 = arith.addf %268, %180 : vector<32x32xf32>
    %c3 = arith.constant 3 : index
    %c0_181 = arith.constant 0 : index
    %c0_182 = arith.constant 0 : index
    %270 = vector.load %arg2[%c3, %c0_181, %c0_182] : memref<4x96x32xf32, #tpu.memory_space<vmem>>, vector<1x96x32xf32>
    %271 = vector.shape_cast %270 : vector<1x96x32xf32> to vector<96x32xf32>
    %c3_183 = arith.constant 3 : index
    %c0_184 = arith.constant 0 : index
    %c0_185 = arith.constant 0 : index
    %272 = vector.load %arg3[%c3_183, %c0_184, %c0_185] : memref<4x1x32xf32, #tpu.memory_space<vmem>>, vector<1x1x32xf32>
    %273 = vector.shape_cast %272 : vector<1x1x32xf32> to vector<1x32xf32>
    %274 = vector.shape_cast %269 : vector<32x32xf32> to vector<2x16x32xf32>
    %c0_186 = arith.constant 0 : index
    %c16_187 = arith.constant 16 : index
    %c0_188 = arith.constant 0 : index
    %275 = vector.load %arg11[%c0_186, %c16_187, %c0_188] : memref<2x32x32xf32, #tpu.memory_space<vmem>>, vector<2x16x32xf32>
    tpu.vector_store %arg11[%c0_186, %c16_187, %c0_188], %274 {strides = array<i32>} : memref<2x32x32xf32, #tpu.memory_space<vmem>>, vector<2x16x32xf32>,
    %c0_189 = arith.constant 0 : index
    %c8_190 = arith.constant 8 : index
    %c0_191 = arith.constant 0 : index
    %276 = vector.load %arg11[%c0_189, %c8_190, %c0_191] : memref<2x32x32xf32, #tpu.memory_space<vmem>>, vector<2x16x32xf32>
    %277 = vector.shape_cast %276 : vector<2x16x32xf32> to vector<32x32xf32>
    %c0_192 = arith.constant 0 : index
    %c12_193 = arith.constant 12 : index
    %c0_194 = arith.constant 0 : index
    %278 = vector.load %arg11[%c0_192, %c12_193, %c0_194] : memref<2x32x32xf32, #tpu.memory_space<vmem>>, vector<2x16x32xf32>
    %279 = vector.shape_cast %278 : vector<2x16x32xf32> to vector<32x32xf32>
    %c0_195 = arith.constant 0 : index
    %c16_196 = arith.constant 16 : index
    %c0_197 = arith.constant 0 : index
    %280 = vector.load %arg11[%c0_195, %c16_196, %c0_197] : memref<2x32x32xf32, #tpu.memory_space<vmem>>, vector<2x16x32xf32>
    %281 = vector.shape_cast %280 : vector<2x16x32xf32> to vector<32x32xf32>
    %282 = tpu.concatenate %277, %279, %281 in 1 : vector<32x32xf32>, vector<32x32xf32>, vector<32x32xf32> -> vector<32x96xf32>
    %cst_198 = arith.constant dense<0.000000e+00> : vector<32x32xf32>
    %283 = tpu.matmul %282, %271, %cst_198 {dimension_numbers = #tpu.dot_dimension_numbers<[1], [0], [0], [1], [0, 0, 1, 1], [], []>} : vector<32x96xf32>, vector<96x32xf32>, vector<32x32xf32> -> vector<32x32xf32>
    %284 = vector.broadcast %273 : vector<1x32xf32> to vector<32x32xf32>
    %285 = arith.addf %283, %284 : vector<32x32xf32>
    %c3_199 = arith.constant 3 : index
    %c0_200 = arith.constant 0 : index
    %c0_201 = arith.constant 0 : index
    %286 = vector.load %arg4[%c3_199, %c0_200, %c0_201] : memref<4x1x32xf32, #tpu.memory_space<vmem>>, vector<1x1x32xf32>
    %287 = vector.shape_cast %286 : vector<1x1x32xf32> to vector<1x32xf32>
    %c3_202 = arith.constant 3 : index
    %c0_203 = arith.constant 0 : index
    %c0_204 = arith.constant 0 : index
    %288 = vector.load %arg5[%c3_202, %c0_203, %c0_204] : memref<4x1x32xf32, #tpu.memory_space<vmem>>, vector<1x1x32xf32>
    %289 = vector.shape_cast %288 : vector<1x1x32xf32> to vector<1x32xf32>
    %cst_205 = arith.constant dense<0.000000e+00> : vector<32xf32>
    %290 = vector.multi_reduction <add>, %285, %cst_205 [1] : vector<32x32xf32> to vector<32xf32>
    %291 = vector.shape_cast %290 : vector<32xf32> to vector<32x1xf32>
    %cst_206 = arith.constant 3.200000e+01 : f32
    %292 = vector.broadcast %cst_206 : f32 to vector<32x1xf32>
    %293 = arith.divf %291, %292 : vector<32x1xf32>
    %294 = vector.broadcast %293 : vector<32x1xf32> to vector<32x32xf32>
    %295 = arith.subf %285, %294 : vector<32x32xf32>
    %296 = arith.mulf %295, %295 : vector<32x32xf32>
    %cst_207 = arith.constant dense<0.000000e+00> : vector<32xf32>
    %297 = vector.multi_reduction <add>, %296, %cst_207 [1] : vector<32x32xf32> to vector<32xf32>
    %298 = vector.shape_cast %297 : vector<32xf32> to vector<32x1xf32>
    %cst_208 = arith.constant 3.200000e+01 : f32
    %299 = vector.broadcast %cst_208 : f32 to vector<32x1xf32>
    %300 = arith.divf %298, %299 : vector<32x1xf32>
    %301 = vector.broadcast %293 : vector<32x1xf32> to vector<32x32xf32>
    %302 = arith.subf %285, %301 : vector<32x32xf32>
    %cst_209 = arith.constant 9.99999993E-9 : f32
    %303 = vector.broadcast %cst_209 : f32 to vector<32x1xf32>
    %304 = arith.addf %300, %303 : vector<32x1xf32>
    %305 = math.rsqrt %304 : vector<32x1xf32>
    %306 = vector.broadcast %305 : vector<32x1xf32> to vector<32x32xf32>
    %307 = arith.mulf %302, %306 : vector<32x32xf32>
    %308 = vector.broadcast %287 : vector<1x32xf32> to vector<32x32xf32>
    %309 = arith.mulf %307, %308 : vector<32x32xf32>
    %310 = vector.broadcast %289 : vector<1x32xf32> to vector<32x32xf32>
    %311 = arith.addf %309, %310 : vector<32x32xf32>
    %cst_210 = arith.constant 0.000000e+00 : f32
    %312 = vector.broadcast %cst_210 : f32 to vector<32x32xf32>
    %313 = arith.maximumf %311, %312 : vector<32x32xf32>
    %c3_211 = arith.constant 3 : index
    %c0_212 = arith.constant 0 : index
    %c0_213 = arith.constant 0 : index
    %314 = vector.load %arg6[%c3_211, %c0_212, %c0_213] : memref<4x96x32xf32, #tpu.memory_space<vmem>>, vector<1x96x32xf32>
    %315 = vector.shape_cast %314 : vector<1x96x32xf32> to vector<96x32xf32>
    %c3_214 = arith.constant 3 : index
    %c0_215 = arith.constant 0 : index
    %c0_216 = arith.constant 0 : index
    %316 = vector.load %arg7[%c3_214, %c0_215, %c0_216] : memref<4x1x32xf32, #tpu.memory_space<vmem>>, vector<1x1x32xf32>
    %317 = vector.shape_cast %316 : vector<1x1x32xf32> to vector<1x32xf32>
    %318 = vector.shape_cast %313 : vector<32x32xf32> to vector<2x16x32xf32>
    %c0_217 = arith.constant 0 : index
    %c16_218 = arith.constant 16 : index
    %c0_219 = arith.constant 0 : index
    %319 = vector.load %arg11[%c0_217, %c16_218, %c0_219] : memref<2x32x32xf32, #tpu.memory_space<vmem>>, vector<2x16x32xf32>
    tpu.vector_store %arg11[%c0_217, %c16_218, %c0_219], %318 {strides = array<i32>} : memref<2x32x32xf32, #tpu.memory_space<vmem>>, vector<2x16x32xf32>,
    %c0_220 = arith.constant 0 : index
    %c8_221 = arith.constant 8 : index
    %c0_222 = arith.constant 0 : index
    %320 = vector.load %arg11[%c0_220, %c8_221, %c0_222] : memref<2x32x32xf32, #tpu.memory_space<vmem>>, vector<2x16x32xf32>
    %321 = vector.shape_cast %320 : vector<2x16x32xf32> to vector<32x32xf32>
    %c0_223 = arith.constant 0 : index
    %c16_224 = arith.constant 16 : index
    %c0_225 = arith.constant 0 : index
    %322 = vector.load %arg11[%c0_223, %c16_224, %c0_225] : memref<2x32x32xf32, #tpu.memory_space<vmem>>, vector<2x16x32xf32>
    %323 = vector.shape_cast %322 : vector<2x16x32xf32> to vector<32x32xf32>
    %324 = tpu.concatenate %321, %323 in 1 : vector<32x32xf32>, vector<32x32xf32> -> vector<32x64xf32>
    %325 = vector.extract_strided_slice %315 {offsets = [32, 0], sizes = [64, 32], strides = [1, 1]} : vector<96x32xf32> to vector<64x32xf32>
    %cst_226 = arith.constant dense<0.000000e+00> : vector<32x32xf32>
    %326 = tpu.matmul %324, %325, %cst_226 {dimension_numbers = #tpu.dot_dimension_numbers<[1], [0], [0], [1], [0, 0, 1, 1], [], []>} : vector<32x64xf32>, vector<64x32xf32>, vector<32x32xf32> -> vector<32x32xf32>
    %327 = vector.broadcast %317 : vector<1x32xf32> to vector<32x32xf32>
    %328 = arith.addf %326, %327 : vector<32x32xf32>
    %c3_227 = arith.constant 3 : index
    %c0_228 = arith.constant 0 : index
    %c0_229 = arith.constant 0 : index
    %329 = vector.load %arg8[%c3_227, %c0_228, %c0_229] : memref<4x1x32xf32, #tpu.memory_space<vmem>>, vector<1x1x32xf32>
    %330 = vector.shape_cast %329 : vector<1x1x32xf32> to vector<1x32xf32>
    %c3_230 = arith.constant 3 : index
    %c0_231 = arith.constant 0 : index
    %c0_232 = arith.constant 0 : index
    %331 = vector.load %arg9[%c3_230, %c0_231, %c0_232] : memref<4x1x32xf32, #tpu.memory_space<vmem>>, vector<1x1x32xf32>
    %332 = vector.shape_cast %331 : vector<1x1x32xf32> to vector<1x32xf32>
    %cst_233 = arith.constant dense<0.000000e+00> : vector<32xf32>
    %333 = vector.multi_reduction <add>, %328, %cst_233 [1] : vector<32x32xf32> to vector<32xf32>
    %334 = vector.shape_cast %333 : vector<32xf32> to vector<32x1xf32>
    %cst_234 = arith.constant 3.200000e+01 : f32
    %335 = vector.broadcast %cst_234 : f32 to vector<32x1xf32>
    %336 = arith.divf %334, %335 : vector<32x1xf32>
    %337 = vector.broadcast %336 : vector<32x1xf32> to vector<32x32xf32>
    %338 = arith.subf %328, %337 : vector<32x32xf32>
    %339 = arith.mulf %338, %338 : vector<32x32xf32>
    %cst_235 = arith.constant dense<0.000000e+00> : vector<32xf32>
    %340 = vector.multi_reduction <add>, %339, %cst_235 [1] : vector<32x32xf32> to vector<32xf32>
    %341 = vector.shape_cast %340 : vector<32xf32> to vector<32x1xf32>
    %cst_236 = arith.constant 3.200000e+01 : f32
    %342 = vector.broadcast %cst_236 : f32 to vector<32x1xf32>
    %343 = arith.divf %341, %342 : vector<32x1xf32>
    %344 = vector.broadcast %336 : vector<32x1xf32> to vector<32x32xf32>
    %345 = arith.subf %328, %344 : vector<32x32xf32>
    %cst_237 = arith.constant 9.99999993E-9 : f32
    %346 = vector.broadcast %cst_237 : f32 to vector<32x1xf32>
    %347 = arith.addf %343, %346 : vector<32x1xf32>
    %348 = math.rsqrt %347 : vector<32x1xf32>
    %349 = vector.broadcast %348 : vector<32x1xf32> to vector<32x32xf32>
    %350 = arith.mulf %345, %349 : vector<32x32xf32>
    %351 = vector.broadcast %330 : vector<1x32xf32> to vector<32x32xf32>
    %352 = arith.mulf %350, %351 : vector<32x32xf32>
    %353 = vector.broadcast %332 : vector<1x32xf32> to vector<32x32xf32>
    %354 = arith.addf %352, %353 : vector<32x32xf32>
    %cst_238 = arith.constant 0.000000e+00 : f32
    %355 = vector.broadcast %cst_238 : f32 to vector<32x32xf32>
    %356 = arith.maximumf %354, %355 : vector<32x32xf32>
    %357 = arith.addf %356, %269 : vector<32x32xf32>
    %358 = vector.shape_cast %357 : vector<32x32xf32> to vector<2x16x32xf32>
    %c0_239 = arith.constant 0 : index
    %c0_240 = arith.constant 0 : index
    %c0_241 = arith.constant 0 : index
    %359 = vector.load %arg10[%c0_239, %c0_240, %c0_241] : memref<2x16x32xf32, #tpu.memory_space<vmem>>, vector<2x16x32xf32>
    tpu.vector_store %arg10[%c0_239, %c0_240, %c0_241], %358 {strides = array<i32>} : memref<2x16x32xf32, #tpu.memory_space<vmem>>, vector<2x16x32xf32>,
    return
  }
  func.func @transform_0(%arg0: i32) -> (i32, i32, i32) {
    %c0_i32 = arith.constant 0 : i32
    %c0_i32_0 = arith.constant 0 : i32
    %c0_i32_1 = arith.constant 0 : i32
    return %arg0, %c0_i32, %c0_i32_0 : i32, i32, i32
  }
  func.func @transform_1(%arg0: i32) -> (i32, i32, i32) {
    %c0_i32 = arith.constant 0 : i32
    %c0_i32_0 = arith.constant 0 : i32
    %c0_i32_1 = arith.constant 0 : i32
    %c0_i32_2 = arith.constant 0 : i32
    return %c0_i32, %c0_i32_0, %c0_i32_1 : i32, i32, i32
  }
  func.func @transform_2(%arg0: i32) -> (i32, i32, i32) {
    %c0_i32 = arith.constant 0 : i32
    %c0_i32_0 = arith.constant 0 : i32
    %c0_i32_1 = arith.constant 0 : i32
    %c0_i32_2 = arith.constant 0 : i32
    return %c0_i32, %c0_i32_0, %c0_i32_1 : i32, i32, i32
  }
  func.func @transform_3(%arg0: i32) -> (i32, i32, i32) {
    %c0_i32 = arith.constant 0 : i32
    %c0_i32_0 = arith.constant 0 : i32
    %c0_i32_1 = arith.constant 0 : i32
    %c0_i32_2 = arith.constant 0 : i32
    return %c0_i32, %c0_i32_0, %c0_i32_1 : i32, i32, i32
  }
  func.func @transform_4(%arg0: i32) -> (i32, i32, i32) {
    %c0_i32 = arith.constant 0 : i32
    %c0_i32_0 = arith.constant 0 : i32
    %c0_i32_1 = arith.constant 0 : i32
    %c0_i32_2 = arith.constant 0 : i32
    return %c0_i32, %c0_i32_0, %c0_i32_1 : i32, i32, i32
  }
  func.func @transform_5(%arg0: i32) -> (i32, i32, i32) {
    %c0_i32 = arith.constant 0 : i32
    %c0_i32_0 = arith.constant 0 : i32
    %c0_i32_1 = arith.constant 0 : i32
    %c0_i32_2 = arith.constant 0 : i32
    return %c0_i32, %c0_i32_0, %c0_i32_1 : i32, i32, i32
  }
  func.func @transform_6(%arg0: i32) -> (i32, i32, i32) {
    %c0_i32 = arith.constant 0 : i32
    %c0_i32_0 = arith.constant 0 : i32
    %c0_i32_1 = arith.constant 0 : i32
    %c0_i32_2 = arith.constant 0 : i32
    return %c0_i32, %c0_i32_0, %c0_i32_1 : i32, i32, i32
  }
  func.func @transform_7(%arg0: i32) -> (i32, i32, i32) {
    %c0_i32 = arith.constant 0 : i32
    %c0_i32_0 = arith.constant 0 : i32
    %c0_i32_1 = arith.constant 0 : i32
    %c0_i32_2 = arith.constant 0 : i32
    return %c0_i32, %c0_i32_0, %c0_i32_1 : i32, i32, i32
  }
  func.func @transform_8(%arg0: i32) -> (i32, i32, i32) {
    %c0_i32 = arith.constant 0 : i32
    %c0_i32_0 = arith.constant 0 : i32
    %c0_i32_1 = arith.constant 0 : i32
    %c0_i32_2 = arith.constant 0 : i32
    return %c0_i32, %c0_i32_0, %c0_i32_1 : i32, i32, i32
  }
  func.func @transform_9(%arg0: i32) -> (i32, i32, i32) {
    %c0_i32 = arith.constant 0 : i32
    %c0_i32_0 = arith.constant 0 : i32
    %c0_i32_1 = arith.constant 0 : i32
    return %arg0, %c0_i32, %c0_i32_0 : i32, i32, i32
  }
}

</mosaic_0001>

<llo_original>
// kernel: tpu_custom_call.1
$region0: #{tpu_custom_call.1}
  #allocation0 [shape = 'u32[]', space=smem, size = 0x4, offset = 0x4, fixed_abs, tag = 'smem constant byte address 0x4 - core index']
  #allocation1 [shape = 'u32[144,128]{1,0:T(1,128)}', space=vmem, size = 0x12000, scoped, tag = 'internal scratch']
  #allocation2 [shape = 'f32[2,32,32]{2,1,0:T(8,128)}', space=vmem, size = 0x8000, scoped, tag = 'scratch operand']
  %s0 = inlined_call_operand.vmem [shape: f32[2,16,32], index: 0, kind: input, shape index: {}]
  %s1 = inlined_call_operand.vmem [shape: f32[4,96,32], index: 1, kind: input, shape index: {}]
  %s2 = inlined_call_operand.vmem [shape: f32[4,1,32], index: 2, kind: input, shape index: {}]
  %s3 = inlined_call_operand.vmem [shape: f32[4,1,32], index: 3, kind: input, shape index: {}]
  %s4 = inlined_call_operand.vmem [shape: f32[4,1,32], index: 4, kind: input, shape index: {}]
  %s5 = inlined_call_operand.vmem [shape: f32[4,96,32], index: 5, kind: input, shape index: {}]
  %s6 = inlined_call_operand.vmem [shape: f32[4,1,32], index: 6, kind: input, shape index: {}]
  %s7 = inlined_call_operand.vmem [shape: f32[4,1,32], index: 7, kind: input, shape index: {}]
  %s8 = inlined_call_operand.vmem [shape: f32[4,1,32], index: 8, kind: input, shape index: {}]
  %s9 = inlined_call_operand.hbm [shape: f32[2,16,32], index: 9, kind: output, shape index: {}]
  %s10 = sld [smem:[#allocation0]]
  $region46: #{tpu_custom_call.1} parent=0
    _
  %s12 = ssub.s32 1, %s10
  %s13 = scalar_select 0, %s12, %s10
  $region1: #{tpu_custom_call.1} parent=0
    #allocation3 [shape = 'u8[16384]{0}', space=vmem, size = 0x4000, scoped, tag = 'output window, operand 0, single buffered']
    #allocation4 [shape = 's32[1]{0}', space=sflag, size = 0x4, scoped, tag = 'scoped memory for tpu_custom_call.1']
    %14 = vsyncpa [#allocation4], 0
    // Predicated region
    $region2: #{tpu_custom_call.1} parent=1 // pred_check
      _
    $region3: #{tpu_custom_call.1} parent=1 // pred_check_branch
      %16 = sbr.rel (0) target = $region5
    $region4: #{tpu_custom_call.1} parent=1 // pred_region
      _
    $region5: #{tpu_custom_call.1} parent=1 // pred_fallthru
      _
    // Predicated region
    $region6: #{tpu_custom_call.1} parent=1 // pred_check
      _
    $region7: #{tpu_custom_call.1} parent=1 // pred_check_branch
      %18 = sbr.rel (0) target = $region9
    $region8: #{tpu_custom_call.1} parent=1 // pred_region
      _
    $region9: #{tpu_custom_call.1} parent=1 // pred_fallthru
      _
    // Predicated region
    $region10: #{tpu_custom_call.1} parent=1 // pred_check
      _
    $region11: #{tpu_custom_call.1} parent=1 // pred_check_branch
      %20 = sbr.rel (0) target = $region13
    $region12: #{tpu_custom_call.1} parent=1 // pred_region
      _
    $region13: #{tpu_custom_call.1} parent=1 // pred_fallthru
      _
    // Predicated region
    $region14: #{tpu_custom_call.1} parent=1 // pred_check
      _
    $region15: #{tpu_custom_call.1} parent=1 // pred_check_branch
      %22 = sbr.rel (0) target = $region17
    $region16: #{tpu_custom_call.1} parent=1 // pred_region
      _
    $region17: #{tpu_custom_call.1} parent=1 // pred_fallthru
      _
    // Predicated region
    $region18: #{tpu_custom_call.1} parent=1 // pred_check
      _
    $region19: #{tpu_custom_call.1} parent=1 // pred_check_branch
      %24 = sbr.rel (0) target = $region21
    $region20: #{tpu_custom_call.1} parent=1 // pred_region
      _
    $region21: #{tpu_custom_call.1} parent=1 // pred_fallthru
      _
    // Predicated region
    $region22: #{tpu_custom_call.1} parent=1 // pred_check
      _
    $region23: #{tpu_custom_call.1} parent=1 // pred_check_branch
      %26 = sbr.rel (0) target = $region25
    $region24: #{tpu_custom_call.1} parent=1 // pred_region
      _
    $region25: #{tpu_custom_call.1} parent=1 // pred_fallthru
      _
    // Predicated region
    $region26: #{tpu_custom_call.1} parent=1 // pred_check
      _
    $region27: #{tpu_custom_call.1} parent=1 // pred_check_branch
      %28 = sbr.rel (0) target = $region29
    $region28: #{tpu_custom_call.1} parent=1 // pred_region
      _
    $region29: #{tpu_custom_call.1} parent=1 // pred_fallthru
      _
    // Predicated region
    $region30: #{tpu_custom_call.1} parent=1 // pred_check
      _
    $region31: #{tpu_custom_call.1} parent=1 // pred_check_branch
      %30 = sbr.rel (0) target = $region33
    $region32: #{tpu_custom_call.1} parent=1 // pred_region
      _
    $region33: #{tpu_custom_call.1} parent=1 // pred_fallthru
      _
    // Predicated region
    $region34: #{tpu_custom_call.1} parent=1 // pred_check
      _
    $region35: #{tpu_custom_call.1} parent=1 // pred_check_branch
      %32 = sbr.rel (0) target = $region37
    $region36: #{tpu_custom_call.1} parent=1 // pred_region
      _
    $region37: #{tpu_custom_call.1} parent=1 // pred_fallthru
      _
    %vm33 = vcmask 261120
    %34 = vst.msk [vmem:[#allocation2] sm:$0xff] %vm33, 0.0
    %35 = vst.msk [vmem:[#allocation2 + $0x8] sm:$0xff] %vm33, 0.0
    %36 = vst.msk [vmem:[#allocation2 + $0x20] sm:$0xff] %vm33, 0.0
    %37 = vst.msk [vmem:[#allocation2 + $0x28] sm:$0xff] %vm33, 0.0
    %v38 = vld [vmem:[%s0] sm:$0xff]
    %v39 = vld [vmem:[%s0 + $0x8] sm:$0xff]
    %v40 = vld [vmem:[%s0 + $0x10] sm:$0xff]
    %v41 = vld [vmem:[%s0 + $0x18] sm:$0xff]
    %v42 = vld [vmem:[%s1] sm:$0xff]
    %v43 = vld [vmem:[%s1 + $0x8] sm:$0xff]
    %v44 = vld [vmem:[%s1 + $0x10] sm:$0xff]
    %v45 = vld [vmem:[%s1 + $0x18] sm:$0xff]
    %v46 = vld [vmem:[%s1 + $0x20] sm:$0xff]
    %v47 = vld [vmem:[%s1 + $0x28] sm:$0xff]
    %v48 = vld [vmem:[%s1 + $0x30] sm:$0xff]
    %v49 = vld [vmem:[%s1 + $0x38] sm:$0xff]
    %v50 = vld [vmem:[%s1 + $0x40] sm:$0xff]
    %v51 = vld [vmem:[%s1 + $0x48] sm:$0xff]
    %v52 = vld [vmem:[%s1 + $0x50] sm:$0xff]
    %v53 = vld [vmem:[%s1 + $0x58] sm:$0xff]
    %v54 = vld [vmem:[%s2] sm:$0x1]
    %55 = vst.msk [vmem:[#allocation2 + $0x10] sm:$0xff] %vm33, %v38
    %56 = vst.msk [vmem:[#allocation2 + $0x18] sm:$0xff] %vm33, %v39
    %57 = vst.msk [vmem:[#allocation2 + $0x30] sm:$0xff] %vm33, %v40
    %58 = vst.msk [vmem:[#allocation2 + $0x38] sm:$0xff] %vm33, %v41
    %v59 = vld [vmem:[#allocation2 + $0xe] sm:$0xff]
    %v60 = vld [vmem:[#allocation2 + $0x16] sm:$0xff]
    %v61 = vld [vmem:[#allocation2 + $0x2e] sm:$0xff]
    %v62 = vld [vmem:[#allocation2 + $0x36] sm:$0xff]
    %v63 = vld [vmem:[#allocation2 + $0xf] sm:$0xff]
    %v64 = vld [vmem:[#allocation2 + $0x17] sm:$0xff]
    %v65 = vld [vmem:[#allocation2 + $0x2f] sm:$0xff]
    %v66 = vld [vmem:[#allocation2 + $0x37] sm:$0xff]
    %v67 = vld [vmem:[#allocation2 + $0x10] sm:$0xff]
    %v68 = vld [vmem:[#allocation2 + $0x18] sm:$0xff]
    %v69 = vld [vmem:[#allocation2 + $0x30] sm:$0xff]
    %v70 = vld [vmem:[#allocation2 + $0x38] sm:$0xff]
    %75 = vrot.lane.b32.xlu0 %v63, 32
    %v76 = vpop.permute.xlu0 %75
    %77 = vrot.lane.b32.xlu0 %v64, 32
    %v78 = vpop.permute.xlu0 %77
    %79 = vrot.lane.b32.xlu0 %v65, 32
    %v80 = vpop.permute.xlu0 %79
    %81 = vrot.lane.b32.xlu0 %v66, 32
    %v82 = vpop.permute.xlu0 %81
    %91 = vrot.lane.b32.xlu0 %v67, 64
    %v92 = vpop.permute.xlu0 %91
    %93 = vrot.lane.b32.xlu0 %v68, 64
    %v94 = vpop.permute.xlu0 %93
    %95 = vrot.lane.b32.xlu0 %v69, 64
    %v96 = vpop.permute.xlu0 %95
    %97 = vrot.lane.b32.xlu0 %v70, 64
    %v98 = vpop.permute.xlu0 %97
    %v103 = vsel %vm33, %v59, %v76
    %v104 = vsel %vm33, %v60, %v78
    %v105 = vsel %vm33, %v61, %v80
    %v106 = vsel %vm33, %v62, %v82
    %vm107 = vcmask 523264
    %v108 = vsel %vm107, %v103, %v92
    %v109 = vsel %vm107, %v104, %v94
    %v110 = vsel %vm107, %v105, %v96
    %v111 = vsel %vm107, %v106, %v98
    %v113 = vlaneseq
    %v114 = vshrl.u32 %v113, 7
    %v115 = vsub.s32 0, %v114
    %v116 = vrot.slane %v54, %v115
    %vm118 = vcmask 785408
    %v120 = vsel %vm118, %v108, 0
    %v123 = vsel %vm118, %v109, 0
    %v126 = vsel %vm118, %v110, 0
    %v129 = vsel %vm118, %v111, 0
    %131 = vmatprep.subr.mxu0 0.0
    %132 = vmatpush1.msra.mxu0 %v42
    %133 = vmatprep.subr.mxu0 0.0
    %134 = vmatpush1.msra.mxu0 %v43
    %135 = vmatprep.subr.mxu0 0.0
    %136 = vmatpush1.msra.mxu0 %v44
    %137 = vmatprep.subr.mxu0 0.0
    %138 = vmatpush1.msra.mxu0 %v45
    %139 = vmatprep.subr.mxu0 0.0
    %140 = vmatpush1.msra.mxu0 %v46
    %141 = vmatprep.subr.mxu0 0.0
    %142 = vmatpush1.msra.mxu0 %v47
    %143 = vmatprep.subr.mxu0 0.0
    %144 = vmatpush1.msra.mxu0 %v48
    %145 = vmatprep.subr.mxu0 0.0
    %146 = vmatpush1.msra.mxu0 %v49
    %147 = vmatprep.subr.mxu0 0.0
    %148 = vmatpush1.msra.mxu0 %v50
    %149 = vmatprep.subr.mxu0 0.0
    %150 = vmatpush1.msra.mxu0 %v51
    %151 = vmatprep.subr.mxu0 0.0
    %152 = vmatpush1.msra.mxu0 %v52
    %153 = vmatprep.subr.mxu0 0.0
    %154 = vmatpush1.msra.mxu0 %v53
    %155 = vmatprep.subr.mxu0 0.0
    %156 = vmatpush1.msra.mxu0 0.0
    %157 = vmatprep.subr.mxu0 0.0
    %158 = vmatpush1.msra.mxu0 0.0
    %159 = vmatprep.subr.mxu0 0.0
    %160 = vmatpush1.msra.mxu0 0.0
    %161 = vmatprep.subr.mxu0 0.0
    %162 = vmatpush1.msra.mxu0 0.0
    %163 = vmatprep.subr.mxu0 0.0
    %164 = vmatpush1.msra.mxu0 0.0
    %165 = vmatprep.subr.mxu0 0.0
    %166 = vmatpush1.msra.mxu0 0.0
    %167 = vmatprep.subr.mxu0 0.0
    %168 = vmatpush1.msra.mxu0 0.0
    %169 = vmatprep.subr.mxu0 0.0
    %170 = vmatpush1.msra.mxu0 0.0
    %171 = vmatprep.subr.mxu0 0.0
    %172 = vmatpush1.msra.mxu0 0.0
    %173 = vmatprep.subr.mxu0 0.0
    %174 = vmatpush1.msra.mxu0 0.0
    %175 = vmatprep.subr.mxu0 0.0
    %176 = vmatpush1.msra.mxu0 0.0
    %177 = vmatprep.subr.mxu0 0.0
    %178 = vmatpush1.msra.mxu0 0.0
    %179 = vmatprep.subr.mxu0 0.0
    %180 = vmatpush1.msra.mxu0 0.0
    %181 = vmatprep.subr.mxu0 0.0
    %182 = vmatpush1.msra.mxu0 0.0
    %183 = vmatprep.subr.mxu0 0.0
    %184 = vmatpush1.msra.mxu0 0.0
    %185 = vmatprep.subr.mxu0 0.0
    %186 = vmatpush1.msra.mxu0 0.0
    %187 = vmatprep.subr.mxu0 0.0
    %188 = vmatpush1.msra.mxu0 0.0
    %189 = vmatprep.subr.mxu0 0.0
    %190 = vmatpush1.msra.mxu0 0.0
    %191 = vmatprep.subr.mxu0 0.0
    %192 = vmatpush1.msra.mxu0 0.0
    %193 = vmatprep.subr.mxu0 0.0
    %194 = vmatpush1.msra.mxu0 0.0
    %195 = vmatprep.mubr.f32.mxu0 0.0
    %196 = vmatmul.mubr.f32.gmra.mrb[0].mxu0 %v120
    %v197 = vpop.f32.mrb[0].mxu0
    %v198 = vadd.f32 %v116, %v197
    %v199 = vpop.f32.mrb[0].mxu0
    %200 = vmatprep.mubr.f32.mxu0 0.0
    %201 = vmatmul.mubr.f32.gmra.mrb[0].mxu0 %v123
    %v202 = vpop.f32.mrb[0].mxu0
    %v203 = vadd.f32 %v116, %v202
    %v204 = vpop.f32.mrb[0].mxu0
    %205 = vmatprep.mubr.f32.mxu0 0.0
    %206 = vmatmul.mubr.f32.gmra.mrb[0].mxu0 %v126
    %v207 = vpop.f32.mrb[0].mxu0
    %v208 = vadd.f32 %v116, %v207
    %v209 = vpop.f32.mrb[0].mxu0
    %210 = vmatprep.mubr.f32.mxu0 0.0
    %211 = vmatmul.mubr.f32.gmra.mrb[0].mxu0 %v129
    %v212 = vpop.f32.mrb[0].mxu0
    %v213 = vadd.f32 %v116, %v212
    %v214 = vpop.f32.mrb[0].mxu0
    %215 = vdwg.mxu0
    %v216 = vld [vmem:[%s3] sm:$0x1]
    %v217 = vld [vmem:[%s4] sm:$0x1]
    %v218 = vsel %vm33, %v198, 0.0
    %219 = vadd.xlane.f32.xlu0 %v218
    %v220 = vpop.xlane.xlu0 %219
    %v221 = vsel %vm33, %v203, 0.0
    %222 = vadd.xlane.f32.xlu0 %v221
    %v223 = vpop.xlane.xlu0 %222
    %v224 = vsel %vm33, %v208, 0.0
    %225 = vadd.xlane.f32.xlu0 %v224
    %v226 = vpop.xlane.xlu0 %225
    %v227 = vsel %vm33, %v213, 0.0
    %228 = vadd.xlane.f32.xlu0 %v227
    %v229 = vpop.xlane.xlu0 %228
    %v230 = vrcp.pop 32.0
    %v231 = vmul.f32 %v220, %v230
    %v232 = vmul.f32 %v223, %v230
    %v233 = vmul.f32 %v226, %v230
    %v234 = vmul.f32 %v229, %v230
    %v235 = vsub.f32 %v198, %v231
    %v236 = vsub.f32 %v203, %v232
    %v237 = vsub.f32 %v208, %v233
    %v238 = vsub.f32 %v213, %v234
    %v239 = vmul.f32 %v235, %v235
    %v240 = vmul.f32 %v236, %v236
    %v241 = vmul.f32 %v237, %v237
    %v242 = vmul.f32 %v238, %v238
    %v243 = vsel %vm33, %v239, 0.0
    %244 = vadd.xlane.f32.xlu0 %v243
    %v245 = vpop.xlane.xlu0 %244
    %v246 = vsel %vm33, %v240, 0.0
    %247 = vadd.xlane.f32.xlu0 %v246
    %v248 = vpop.xlane.xlu0 %247
    %v249 = vsel %vm33, %v241, 0.0
    %250 = vadd.xlane.f32.xlu0 %v249
    %v251 = vpop.xlane.xlu0 %250
    %v252 = vsel %vm33, %v242, 0.0
    %253 = vadd.xlane.f32.xlu0 %v252
    %v254 = vpop.xlane.xlu0 %253
    %v255 = vmul.f32 %v245, %v230
    %v256 = vmul.f32 %v248, %v230
    %v257 = vmul.f32 %v251, %v230
    %v258 = vmul.f32 %v254, %v230
    %v259 = vadd.f32 %v255, 1e-08
    %v260 = vadd.f32 %v256, 1e-08
    %v261 = vadd.f32 %v257, 1e-08
    %v262 = vadd.f32 %v258, 1e-08
    %v263 = vrsqrt.pop %v259
    %v264 = vrsqrt.pop %v260
    %v265 = vrsqrt.pop %v261
    %v266 = vrsqrt.pop %v262
    %v267 = vmul.f32 %v235, %v263
    %v268 = vmul.f32 %v236, %v264
    %v269 = vmul.f32 %v237, %v265
    %v270 = vmul.f32 %v238, %v266
    %v272 = vlaneseq
    %v273 = vshrl.u32 %v272, 7
    %v274 = vsub.s32 0, %v273
    %v275 = vrot.slane %v216, %v274
    %v277 = vmul.f32 %v267, %v275
    %v278 = vmul.f32 %v268, %v275
    %v279 = vmul.f32 %v269, %v275
    %v280 = vmul.f32 %v270, %v275
    %v282 = vlaneseq
    %v283 = vshrl.u32 %v282, 7
    %v284 = vsub.s32 0, %v283
    %v285 = vrot.slane %v217, %v284
    %v287 = vadd.f32 %v277, %v285
    %v288 = vadd.f32 %v278, %v285
    %v289 = vadd.f32 %v279, %v285
    %v290 = vadd.f32 %v280, %v285
    %v291 = vmax.f32 %v287, 0.0
    %v292 = vmax.f32 %v288, 0.0
    %v293 = vmax.f32 %v289, 0.0
    %v294 = vmax.f32 %v290, 0.0
    %v295 = vld [vmem:[%s5] sm:$0xff]
    %v296 = vld [vmem:[%s5 + $0x8] sm:$0xff]
    %v297 = vld [vmem:[%s5 + $0x10] sm:$0xff]
    %v298 = vld [vmem:[%s5 + $0x18] sm:$0xff]
    %v299 = vld [vmem:[%s5 + $0x20] sm:$0xff]
    %v300 = vld [vmem:[%s5 + $0x28] sm:$0xff]
    %v301 = vld [vmem:[%s5 + $0x30] sm:$0xff]
    %v302 = vld [vmem:[%s5 + $0x38] sm:$0xff]
    %v303 = vld [vmem:[%s5 + $0x40] sm:$0xff]
    %v304 = vld [vmem:[%s5 + $0x48] sm:$0xff]
    %v305 = vld [vmem:[%s5 + $0x50] sm:$0xff]
    %v306 = vld [vmem:[%s5 + $0x58] sm:$0xff]
    %v307 = vld [vmem:[%s6] sm:$0x1]
    %308 = vst.msk [vmem:[#allocation2 + $0x10] sm:$0xff] %vm33, %v291
    %309 = vst.msk [vmem:[#allocation2 + $0x18] sm:$0xff] %vm33, %v292
    %310 = vst.msk [vmem:[#allocation2 + $0x30] sm:$0xff] %vm33, %v293
    %311 = vst.msk [vmem:[#allocation2 + $0x38] sm:$0xff] %vm33, %v294
    %v312 = vld [vmem:[#allocation2 + $0xc] sm:$0xff]
    %v313 = vld [vmem:[#allocation2 + $0x14] sm:$0xff]
    %v314 = vld [vmem:[#allocation2 + $0x2c] sm:$0xff]
    %v315 = vld [vmem:[#allocation2 + $0x34] sm:$0xff]
    %v316 = vld [vmem:[#allocation2 + $0xe] sm:$0xff]
    %v317 = vld [vmem:[#allocation2 + $0x16] sm:$0xff]
    %v318 = vld [vmem:[#allocation2 + $0x2e] sm:$0xff]
    %v319 = vld [vmem:[#allocation2 + $0x36] sm:$0xff]
    %v320 = vld [vmem:[#allocation2 + $0x10] sm:$0xff]
    %v321 = vld [vmem:[#allocation2 + $0x18] sm:$0xff]
    %v322 = vld [vmem:[#allocation2 + $0x30] sm:$0xff]
    %v323 = vld [vmem:[#allocation2 + $0x38] sm:$0xff]
    %328 = vrot.lane.b32.xlu0 %v316, 32
    %v329 = vpop.permute.xlu0 %328
    %330 = vrot.lane.b32.xlu0 %v317, 32
    %v331 = vpop.permute.xlu0 %330
    %332 = vrot.lane.b32.xlu0 %v318, 32
    %v333 = vpop.permute.xlu0 %332
    %334 = vrot.lane.b32.xlu0 %v319, 32
    %v335 = vpop.permute.xlu0 %334
    %344 = vrot.lane.b32.xlu0 %v320, 64
    %v345 = vpop.permute.xlu0 %344
    %346 = vrot.lane.b32.xlu0 %v321, 64
    %v347 = vpop.permute.xlu0 %346
    %348 = vrot.lane.b32.xlu0 %v322, 64
    %v349 = vpop.permute.xlu0 %348
    %350 = vrot.lane.b32.xlu0 %v323, 64
    %v351 = vpop.permute.xlu0 %350
    %v356 = vsel %vm33, %v312, %v329
    %v357 = vsel %vm33, %v313, %v331
    %v358 = vsel %vm33, %v314, %v333
    %v359 = vsel %vm33, %v315, %v335
    %v360 = vsel %vm107, %v356, %v345
    %v361 = vsel %vm107, %v357, %v347
    %v362 = vsel %vm107, %v358, %v349
    %v363 = vsel %vm107, %v359, %v351
    %v365 = vlaneseq
    %v366 = vshrl.u32 %v365, 7
    %v367 = vsub.s32 0, %v366
    %v368 = vrot.slane %v307, %v367
    %v371 = vsel %vm118, %v360, 0
    %v374 = vsel %vm118, %v361, 0
    %v377 = vsel %vm118, %v362, 0
    %v380 = vsel %vm118, %v363, 0
    %382 = vmatprep.subr.mxu0 0.0
    %383 = vmatpush1.msra.mxu0 %v295
    %384 = vmatprep.subr.mxu0 0.0
    %385 = vmatpush1.msra.mxu0 %v296
    %386 = vmatprep.subr.mxu0 0.0
    %387 = vmatpush1.msra.mxu0 %v297
    %388 = vmatprep.subr.mxu0 0.0
    %389 = vmatpush1.msra.mxu0 %v298
    %390 = vmatprep.subr.mxu0 0.0
    %391 = vmatpush1.msra.mxu0 %v299
    %392 = vmatprep.subr.mxu0 0.0
    %393 = vmatpush1.msra.mxu0 %v300
    %394 = vmatprep.subr.mxu0 0.0
    %395 = vmatpush1.msra.mxu0 %v301
    %396 = vmatprep.subr.mxu0 0.0
    %397 = vmatpush1.msra.mxu0 %v302
    %398 = vmatprep.subr.mxu0 0.0
    %399 = vmatpush1.msra.mxu0 %v303
    %400 = vmatprep.subr.mxu0 0.0
    %401 = vmatpush1.msra.mxu0 %v304
    %402 = vmatprep.subr.mxu0 0.0
    %403 = vmatpush1.msra.mxu0 %v305
    %404 = vmatprep.subr.mxu0 0.0
    %405 = vmatpush1.msra.mxu0 %v306
    %406 = vmatprep.subr.mxu0 0.0
    %407 = vmatpush1.msra.mxu0 0.0
    %408 = vmatprep.subr.mxu0 0.0
    %409 = vmatpush1.msra.mxu0 0.0
    %410 = vmatprep.subr.mxu0 0.0
    %411 = vmatpush1.msra.mxu0 0.0
    %412 = vmatprep.subr.mxu0 0.0
    %413 = vmatpush1.msra.mxu0 0.0
    %414 = vmatprep.subr.mxu0 0.0
    %415 = vmatpush1.msra.mxu0 0.0
    %416 = vmatprep.subr.mxu0 0.0
    %417 = vmatpush1.msra.mxu0 0.0
    %418 = vmatprep.subr.mxu0 0.0
    %419 = vmatpush1.msra.mxu0 0.0
    %420 = vmatprep.subr.mxu0 0.0
    %421 = vmatpush1.msra.mxu0 0.0
    %422 = vmatprep.subr.mxu0 0.0
    %423 = vmatpush1.msra.mxu0 0.0
    %424 = vmatprep.subr.mxu0 0.0
    %425 = vmatpush1.msra.mxu0 0.0
    %426 = vmatprep.subr.mxu0 0.0
    %427 = vmatpush1.msra.mxu0 0.0
    %428 = vmatprep.subr.mxu0 0.0
    %429 = vmatpush1.msra.mxu0 0.0
    %430 = vmatprep.subr.mxu0 0.0
    %431 = vmatpush1.msra.mxu0 0.0
    %432 = vmatprep.subr.mxu0 0.0
    %433 = vmatpush1.msra.mxu0 0.0
    %434 = vmatprep.subr.mxu0 0.0
    %435 = vmatpush1.msra.mxu0 0.0
    %436 = vmatprep.subr.mxu0 0.0
    %437 = vmatpush1.msra.mxu0 0.0
    %438 = vmatprep.subr.mxu0 0.0
    %439 = vmatpush1.msra.mxu0 0.0
    %440 = vmatprep.subr.mxu0 0.0
    %441 = vmatpush1.msra.mxu0 0.0
    %442 = vmatprep.subr.mxu0 0.0
    %443 = vmatpush1.msra.mxu0 0.0
    %444 = vmatprep.subr.mxu0 0.0
    %445 = vmatpush1.msra.mxu0 0.0
    %446 = vmatprep.mubr.f32.mxu0 0.0
    %447 = vmatmul.mubr.f32.gmra.mrb[0].mxu0 %v371
    %v448 = vpop.f32.mrb[0].mxu0
    %v449 = vadd.f32 %v368, %v448
    %v450 = vpop.f32.mrb[0].mxu0
    %451 = vmatprep.mubr.f32.mxu0 0.0
    %452 = vmatmul.mubr.f32.gmra.mrb[0].mxu0 %v374
    %v453 = vpop.f32.mrb[0].mxu0
    %v454 = vadd.f32 %v368, %v453
    %v455 = vpop.f32.mrb[0].mxu0
    %456 = vmatprep.mubr.f32.mxu0 0.0
    %457 = vmatmul.mubr.f32.gmra.mrb[0].mxu0 %v377
    %v458 = vpop.f32.mrb[0].mxu0
    %v459 = vadd.f32 %v368, %v458
    %v460 = vpop.f32.mrb[0].mxu0
    %461 = vmatprep.mubr.f32.mxu0 0.0
    %462 = vmatmul.mubr.f32.gmra.mrb[0].mxu0 %v380
    %v463 = vpop.f32.mrb[0].mxu0
    %v464 = vadd.f32 %v368, %v463
    %v465 = vpop.f32.mrb[0].mxu0
    %466 = vdwg.mxu0
    %v467 = vld [vmem:[%s7] sm:$0x1]
    %v468 = vld [vmem:[%s8] sm:$0x1]
    %v469 = vsel %vm33, %v449, 0.0
    %470 = vadd.xlane.f32.xlu0 %v469
    %v471 = vpop.xlane.xlu0 %470
    %v472 = vsel %vm33, %v454, 0.0
    %473 = vadd.xlane.f32.xlu0 %v472
    %v474 = vpop.xlane.xlu0 %473
    %v475 = vsel %vm33, %v459, 0.0
    %476 = vadd.xlane.f32.xlu0 %v475
    %v477 = vpop.xlane.xlu0 %476
    %v478 = vsel %vm33, %v464, 0.0
    %479 = vadd.xlane.f32.xlu0 %v478
    %v480 = vpop.xlane.xlu0 %479
    %v481 = vmul.f32 %v471, %v230
    %v482 = vmul.f32 %v474, %v230
    %v483 = vmul.f32 %v477, %v230
    %v484 = vmul.f32 %v480, %v230
    %v485 = vsub.f32 %v449, %v481
    %v486 = vsub.f32 %v454, %v482
    %v487 = vsub.f32 %v459, %v483
    %v488 = vsub.f32 %v464, %v484
    %v489 = vmul.f32 %v485, %v485
    %v490 = vmul.f32 %v486, %v486
    %v491 = vmul.f32 %v487, %v487
    %v492 = vmul.f32 %v488, %v488
    %v493 = vsel %vm33, %v489, 0.0
    %494 = vadd.xlane.f32.xlu0 %v493
    %v495 = vpop.xlane.xlu0 %494
    %v496 = vsel %vm33, %v490, 0.0
    %497 = vadd.xlane.f32.xlu0 %v496
    %v498 = vpop.xlane.xlu0 %497
    %v499 = vsel %vm33, %v491, 0.0
    %500 = vadd.xlane.f32.xlu0 %v499
    %v501 = vpop.xlane.xlu0 %500
    %v502 = vsel %vm33, %v492, 0.0
    %503 = vadd.xlane.f32.xlu0 %v502
    %v504 = vpop.xlane.xlu0 %503
    %v505 = vmul.f32 %v495, %v230
    %v506 = vmul.f32 %v498, %v230
    %v507 = vmul.f32 %v501, %v230
    %v508 = vmul.f32 %v504, %v230
    %v509 = vadd.f32 %v505, 1e-08
    %v510 = vadd.f32 %v506, 1e-08
    %v511 = vadd.f32 %v507, 1e-08
    %v512 = vadd.f32 %v508, 1e-08
    %v513 = vrsqrt.pop %v509
    %v514 = vrsqrt.pop %v510
    %v515 = vrsqrt.pop %v511
    %v516 = vrsqrt.pop %v512
    %v517 = vmul.f32 %v485, %v513
    %v518 = vmul.f32 %v486, %v514
    %v519 = vmul.f32 %v487, %v515
    %v520 = vmul.f32 %v488, %v516
    %v522 = vlaneseq
    %v523 = vshrl.u32 %v522, 7
    %v524 = vsub.s32 0, %v523
    %v525 = vrot.slane %v467, %v524
    %v527 = vmul.f32 %v517, %v525
    %v528 = vmul.f32 %v518, %v525
    %v529 = vmul.f32 %v519, %v525
    %v530 = vmul.f32 %v520, %v525
    %v532 = vlaneseq
    %v533 = vshrl.u32 %v532, 7
    %v534 = vsub.s32 0, %v533
    %v535 = vrot.slane %v468, %v534
    %v537 = vadd.f32 %v527, %v535
    %v538 = vadd.f32 %v528, %v535
    %v539 = vadd.f32 %v529, %v535
    %v540 = vadd.f32 %v530, %v535
    %v541 = vmax.f32 %v537, 0.0
    %v542 = vmax.f32 %v538, 0.0
    %v543 = vmax.f32 %v539, 0.0
    %v544 = vmax.f32 %v540, 0.0
    %v545 = vadd.f32 %v541, %v38
    %v546 = vadd.f32 %v542, %v39
    %v547 = vadd.f32 %v543, %v40
    %v548 = vadd.f32 %v544, %v41
    %s549 = scalar_lea.vmem %s1, 96
    %v550 = vld [vmem:[%s549] sm:$0xff]
    %v551 = vld [vmem:[%s549 + $0x8] sm:$0xff]
    %v552 = vld [vmem:[%s549 + $0x10] sm:$0xff]
    %v553 = vld [vmem:[%s549 + $0x18] sm:$0xff]
    %v554 = vld [vmem:[%s549 + $0x20] sm:$0xff]
    %v555 = vld [vmem:[%s549 + $0x28] sm:$0xff]
    %v556 = vld [vmem:[%s549 + $0x30] sm:$0xff]
    %v557 = vld [vmem:[%s549 + $0x38] sm:$0xff]
    %v558 = vld [vmem:[%s549 + $0x40] sm:$0xff]
    %v559 = vld [vmem:[%s549 + $0x48] sm:$0xff]
    %v560 = vld [vmem:[%s549 + $0x50] sm:$0xff]
    %v561 = vld [vmem:[%s549 + $0x58] sm:$0xff]
    %s562 = scalar_lea.vmem %s2, 1
    %v563 = vld [vmem:[%s562] sm:$0x1]
    %564 = vst.msk [vmem:[#allocation2 + $0x10] sm:$0xff] %vm33, %v545
    %565 = vst.msk [vmem:[#allocation2 + $0x18] sm:$0xff] %vm33, %v546
    %566 = vst.msk [vmem:[#allocation2 + $0x30] sm:$0xff] %vm33, %v547
    %567 = vst.msk [vmem:[#allocation2 + $0x38] sm:$0xff] %vm33, %v548
    %v568 = vld [vmem:[#allocation2 + $0x8] sm:$0xff]
    %v569 = vld [vmem:[#allocation2 + $0x10] sm:$0xff]
    %v570 = vld [vmem:[#allocation2 + $0x28] sm:$0xff]
    %v571 = vld [vmem:[#allocation2 + $0x30] sm:$0xff]
    %v572 = vld [vmem:[#allocation2 + $0xc] sm:$0xff]
    %v573 = vld [vmem:[#allocation2 + $0x14] sm:$0xff]
    %v574 = vld [vmem:[#allocation2 + $0x2c] sm:$0xff]
    %v575 = vld [vmem:[#allocation2 + $0x34] sm:$0xff]
    %v576 = vld [vmem:[#allocation2 + $0x18] sm:$0xff]
    %v577 = vld [vmem:[#allocation2 + $0x38] sm:$0xff]
    %582 = vrot.lane.b32.xlu0 %v572, 32
    %v583 = vpop.permute.xlu0 %582
    %584 = vrot.lane.b32.xlu0 %v573, 32
    %v585 = vpop.permute.xlu0 %584
    %586 = vrot.lane.b32.xlu0 %v574, 32
    %v587 = vpop.permute.xlu0 %586
    %588 = vrot.lane.b32.xlu0 %v575, 32
    %v589 = vpop.permute.xlu0 %588
    %598 = vrot.lane.b32.xlu0 %v569, 64
    %v599 = vpop.permute.xlu0 %598
    %600 = vrot.lane.b32.xlu0 %v576, 64
    %v601 = vpop.permute.xlu0 %600
    %602 = vrot.lane.b32.xlu0 %v571, 64
    %v603 = vpop.permute.xlu0 %602
    %604 = vrot.lane.b32.xlu0 %v577, 64
    %v605 = vpop.permute.xlu0 %604
    %v610 = vsel %vm33, %v568, %v583
    %v611 = vsel %vm33, %v569, %v585
    %v612 = vsel %vm33, %v570, %v587
    %v613 = vsel %vm33, %v571, %v589
    %v614 = vsel %vm107, %v610, %v599
    %v615 = vsel %vm107, %v611, %v601
    %v616 = vsel %vm107, %v612, %v603
    %v617 = vsel %vm107, %v613, %v605
    %v619 = vlaneseq
    %v620 = vshrl.u32 %v619, 7
    %v621 = vsub.s32 0, %v620
    %v622 = vrot.slane %v563, %v621
    %v625 = vsel %vm118, %v614, 0
    %v628 = vsel %vm118, %v615, 0
    %v631 = vsel %vm118, %v616, 0
    %v634 = vsel %vm118, %v617, 0
    %636 = vmatprep.subr.mxu0 0.0
    %637 = vmatpush1.msra.mxu0 %v550
    %638 = vmatprep.subr.mxu0 0.0
    %639 = vmatpush1.msra.mxu0 %v551
    %640 = vmatprep.subr.mxu0 0.0
    %641 = vmatpush1.msra.mxu0 %v552
    %642 = vmatprep.subr.mxu0 0.0
    %643 = vmatpush1.msra.mxu0 %v553
    %644 = vmatprep.subr.mxu0 0.0
    %645 = vmatpush1.msra.mxu0 %v554
    %646 = vmatprep.subr.mxu0 0.0
    %647 = vmatpush1.msra.mxu0 %v555
    %648 = vmatprep.subr.mxu0 0.0
    %649 = vmatpush1.msra.mxu0 %v556
    %650 = vmatprep.subr.mxu0 0.0
    %651 = vmatpush1.msra.mxu0 %v557
    %652 = vmatprep.subr.mxu0 0.0
    %653 = vmatpush1.msra.mxu0 %v558
    %654 = vmatprep.subr.mxu0 0.0
    %655 = vmatpush1.msra.mxu0 %v559
    %656 = vmatprep.subr.mxu0 0.0
    %657 = vmatpush1.msra.mxu0 %v560
    %658 = vmatprep.subr.mxu0 0.0
    %659 = vmatpush1.msra.mxu0 %v561
    %660 = vmatprep.subr.mxu0 0.0
    %661 = vmatpush1.msra.mxu0 0.0
    %662 = vmatprep.subr.mxu0 0.0
    %663 = vmatpush1.msra.mxu0 0.0
    %664 = vmatprep.subr.mxu0 0.0
    %665 = vmatpush1.msra.mxu0 0.0
    %666 = vmatprep.subr.mxu0 0.0
    %667 = vmatpush1.msra.mxu0 0.0
    %668 = vmatprep.subr.mxu0 0.0
    %669 = vmatpush1.msra.mxu0 0.0
    %670 = vmatprep.subr.mxu0 0.0
    %671 = vmatpush1.msra.mxu0 0.0
    %672 = vmatprep.subr.mxu0 0.0
    %673 = vmatpush1.msra.mxu0 0.0
    %674 = vmatprep.subr.mxu0 0.0
    %675 = vmatpush1.msra.mxu0 0.0
    %676 = vmatprep.subr.mxu0 0.0
    %677 = vmatpush1.msra.mxu0 0.0
    %678 = vmatprep.subr.mxu0 0.0
    %679 = vmatpush1.msra.mxu0 0.0
    %680 = vmatprep.subr.mxu0 0.0
    %681 = vmatpush1.msra.mxu0 0.0
    %682 = vmatprep.subr.mxu0 0.0
    %683 = vmatpush1.msra.mxu0 0.0
    %684 = vmatprep.subr.mxu0 0.0
    %685 = vmatpush1.msra.mxu0 0.0
    %686 = vmatprep.subr.mxu0 0.0
    %687 = vmatpush1.msra.mxu0 0.0
    %688 = vmatprep.subr.mxu0 0.0
    %689 = vmatpush1.msra.mxu0 0.0
    %690 = vmatprep.subr.mxu0 0.0
    %691 = vmatpush1.msra.mxu0 0.0
    %692 = vmatprep.subr.mxu0 0.0
    %693 = vmatpush1.msra.mxu0 0.0
    %694 = vmatprep.subr.mxu0 0.0
    %695 = vmatpush1.msra.mxu0 0.0
    %696 = vmatprep.subr.mxu0 0.0
    %697 = vmatpush1.msra.mxu0 0.0
    %698 = vmatprep.subr.mxu0 0.0
    %699 = vmatpush1.msra.mxu0 0.0
    %700 = vmatprep.mubr.f32.mxu0 0.0
    %701 = vmatmul.mubr.f32.gmra.mrb[0].mxu0 %v625
    %v702 = vpop.f32.mrb[0].mxu0
    %v703 = vadd.f32 %v622, %v702
    %v704 = vpop.f32.mrb[0].mxu0
    %705 = vmatprep.mubr.f32.mxu0 0.0
    %706 = vmatmul.mubr.f32.gmra.mrb[0].mxu0 %v628
    %v707 = vpop.f32.mrb[0].mxu0
    %v708 = vadd.f32 %v622, %v707
    %v709 = vpop.f32.mrb[0].mxu0
    %710 = vmatprep.mubr.f32.mxu0 0.0
    %711 = vmatmul.mubr.f32.gmra.mrb[0].mxu0 %v631
    %v712 = vpop.f32.mrb[0].mxu0
    %v713 = vadd.f32 %v622, %v712
    %v714 = vpop.f32.mrb[0].mxu0
    %715 = vmatprep.mubr.f32.mxu0 0.0
    %716 = vmatmul.mubr.f32.gmra.mrb[0].mxu0 %v634
    %v717 = vpop.f32.mrb[0].mxu0
    %v718 = vadd.f32 %v622, %v717
    %v719 = vpop.f32.mrb[0].mxu0
    %720 = vdwg.mxu0
    %s721 = scalar_lea.vmem %s3, 1
    %v722 = vld [vmem:[%s721] sm:$0x1]
    %s723 = scalar_lea.vmem %s4, 1
    %v724 = vld [vmem:[%s723] sm:$0x1]
    %v725 = vsel %vm33, %v703, 0.0
    %726 = vadd.xlane.f32.xlu0 %v725
    %v727 = vpop.xlane.xlu0 %726
    %v728 = vsel %vm33, %v708, 0.0
    %729 = vadd.xlane.f32.xlu0 %v728
    %v730 = vpop.xlane.xlu0 %729
    %v731 = vsel %vm33, %v713, 0.0
    %732 = vadd.xlane.f32.xlu0 %v731
    %v733 = vpop.xlane.xlu0 %732
    %v734 = vsel %vm33, %v718, 0.0
    %735 = vadd.xlane.f32.xlu0 %v734
    %v736 = vpop.xlane.xlu0 %735
    %v737 = vmul.f32 %v727, %v230
    %v738 = vmul.f32 %v730, %v230
    %v739 = vmul.f32 %v733, %v230
    %v740 = vmul.f32 %v736, %v230
    %v741 = vsub.f32 %v703, %v737
    %v742 = vsub.f32 %v708, %v738
    %v743 = vsub.f32 %v713, %v739
    %v744 = vsub.f32 %v718, %v740
    %v745 = vmul.f32 %v741, %v741
    %v746 = vmul.f32 %v742, %v742
    %v747 = vmul.f32 %v743, %v743
    %v748 = vmul.f32 %v744, %v744
    %v749 = vsel %vm33, %v745, 0.0
    %750 = vadd.xlane.f32.xlu0 %v749
    %v751 = vpop.xlane.xlu0 %750
    %v752 = vsel %vm33, %v746, 0.0
    %753 = vadd.xlane.f32.xlu0 %v752
    %v754 = vpop.xlane.xlu0 %753
    %v755 = vsel %vm33, %v747, 0.0
    %756 = vadd.xlane.f32.xlu0 %v755
    %v757 = vpop.xlane.xlu0 %756
    %v758 = vsel %vm33, %v748, 0.0
    %759 = vadd.xlane.f32.xlu0 %v758
    %v760 = vpop.xlane.xlu0 %759
    %v761 = vmul.f32 %v751, %v230
    %v762 = vmul.f32 %v754, %v230
    %v763 = vmul.f32 %v757, %v230
    %v764 = vmul.f32 %v760, %v230
    %v765 = vadd.f32 %v761, 1e-08
    %v766 = vadd.f32 %v762, 1e-08
    %v767 = vadd.f32 %v763, 1e-08
    %v768 = vadd.f32 %v764, 1e-08
    %v769 = vrsqrt.pop %v765
    %v770 = vrsqrt.pop %v766
    %v771 = vrsqrt.pop %v767
    %v772 = vrsqrt.pop %v768
    %v773 = vmul.f32 %v741, %v769
    %v774 = vmul.f32 %v742, %v770
    %v775 = vmul.f32 %v743, %v771
    %v776 = vmul.f32 %v744, %v772
    %v778 = vlaneseq
    %v779 = vshrl.u32 %v778, 7
    %v780 = vsub.s32 0, %v779
    %v781 = vrot.slane %v722, %v780
    %v783 = vmul.f32 %v773, %v781
    %v784 = vmul.f32 %v774, %v781
    %v785 = vmul.f32 %v775, %v781
    %v786 = vmul.f32 %v776, %v781
    %v788 = vlaneseq
    %v789 = vshrl.u32 %v788, 7
    %v790 = vsub.s32 0, %v789
    %v791 = vrot.slane %v724, %v790
    %v793 = vadd.f32 %v783, %v791
    %v794 = vadd.f32 %v784, %v791
    %v795 = vadd.f32 %v785, %v791
    %v796 = vadd.f32 %v786, %v791
    %v797 = vmax.f32 %v793, 0.0
    %v798 = vmax.f32 %v794, 0.0
    %v799 = vmax.f32 %v795, 0.0
    %v800 = vmax.f32 %v796, 0.0
    %s801 = scalar_lea.vmem %s5, 96
    %v802 = vld [vmem:[%s801 + $0x20] sm:$0xff]
    %v803 = vld [vmem:[%s801 + $0x28] sm:$0xff]
    %v804 = vld [vmem:[%s801 + $0x30] sm:$0xff]
    %v805 = vld [vmem:[%s801 + $0x38] sm:$0xff]
    %v806 = vld [vmem:[%s801 + $0x40] sm:$0xff]
    %v807 = vld [vmem:[%s801 + $0x48] sm:$0xff]
    %v808 = vld [vmem:[%s801 + $0x50] sm:$0xff]
    %v809 = vld [vmem:[%s801 + $0x58] sm:$0xff]
    %s810 = scalar_lea.vmem %s6, 1
    %v811 = vld [vmem:[%s810] sm:$0x1]
    %812 = vst.msk [vmem:[#allocation2 + $0x10] sm:$0xff] %vm33, %v797
    %813 = vst.msk [vmem:[#allocation2 + $0x18] sm:$0xff] %vm33, %v798
    %814 = vst.msk [vmem:[#allocation2 + $0x30] sm:$0xff] %vm33, %v799
    %815 = vst.msk [vmem:[#allocation2 + $0x38] sm:$0xff] %vm33, %v800
    %v816 = vld [vmem:[#allocation2 + $0x8] sm:$0xff]
    %v817 = vld [vmem:[#allocation2 + $0x10] sm:$0xff]
    %v818 = vld [vmem:[#allocation2 + $0x28] sm:$0xff]
    %v819 = vld [vmem:[#allocation2 + $0x30] sm:$0xff]
    %v820 = vld [vmem:[#allocation2 + $0x18] sm:$0xff]
    %v821 = vld [vmem:[#allocation2 + $0x38] sm:$0xff]
    %826 = vrot.lane.b32.xlu0 %v817, 32
    %v827 = vpop.permute.xlu0 %826
    %828 = vrot.lane.b32.xlu0 %v820, 32
    %v829 = vpop.permute.xlu0 %828
    %830 = vrot.lane.b32.xlu0 %v819, 32
    %v831 = vpop.permute.xlu0 %830
    %832 = vrot.lane.b32.xlu0 %v821, 32
    %v833 = vpop.permute.xlu0 %832
    %v838 = vsel %vm33, %v816, %v827
    %v839 = vsel %vm33, %v817, %v829
    %v840 = vsel %vm33, %v818, %v831
    %v841 = vsel %vm33, %v819, %v833
    %v843 = vlaneseq
    %v844 = vshrl.u32 %v843, 7
    %v845 = vsub.s32 0, %v844
    %v846 = vrot.slane %v811, %v845
    %v849 = vsel %vm107, %v838, 0
    %v852 = vsel %vm107, %v839, 0
    %v855 = vsel %vm107, %v840, 0
    %v858 = vsel %vm107, %v841, 0
    %860 = vmatprep.subr.mxu0 0.0
    %861 = vmatpush1.msra.mxu0 %v802
    %862 = vmatprep.subr.mxu0 0.0
    %863 = vmatpush1.msra.mxu0 %v803
    %864 = vmatprep.subr.mxu0 0.0
    %865 = vmatpush1.msra.mxu0 %v804
    %866 = vmatprep.subr.mxu0 0.0
    %867 = vmatpush1.msra.mxu0 %v805
    %868 = vmatprep.subr.mxu0 0.0
    %869 = vmatpush1.msra.mxu0 %v806
    %870 = vmatprep.subr.mxu0 0.0
    %871 = vmatpush1.msra.mxu0 %v807
    %872 = vmatprep.subr.mxu0 0.0
    %873 = vmatpush1.msra.mxu0 %v808
    %874 = vmatprep.subr.mxu0 0.0
    %875 = vmatpush1.msra.mxu0 %v809
    %876 = vmatprep.subr.mxu0 0.0
    %877 = vmatpush1.msra.mxu0 0.0
    %878 = vmatprep.subr.mxu0 0.0
    %879 = vmatpush1.msra.mxu0 0.0
    %880 = vmatprep.subr.mxu0 0.0
    %881 = vmatpush1.msra.mxu0 0.0
    %882 = vmatprep.subr.mxu0 0.0
    %883 = vmatpush1.msra.mxu0 0.0
    %884 = vmatprep.subr.mxu0 0.0
    %885 = vmatpush1.msra.mxu0 0.0
    %886 = vmatprep.subr.mxu0 0.0
    %887 = vmatpush1.msra.mxu0 0.0
    %888 = vmatprep.subr.mxu0 0.0
    %889 = vmatpush1.msra.mxu0 0.0
    %890 = vmatprep.subr.mxu0 0.0
    %891 = vmatpush1.msra.mxu0 0.0
    %892 = vmatprep.subr.mxu0 0.0
    %893 = vmatpush1.msra.mxu0 0.0
    %894 = vmatprep.subr.mxu0 0.0
    %895 = vmatpush1.msra.mxu0 0.0
    %896 = vmatprep.subr.mxu0 0.0
    %897 = vmatpush1.msra.mxu0 0.0
    %898 = vmatprep.subr.mxu0 0.0
    %899 = vmatpush1.msra.mxu0 0.0
    %900 = vmatprep.subr.mxu0 0.0
    %901 = vmatpush1.msra.mxu0 0.0
    %902 = vmatprep.subr.mxu0 0.0
    %903 = vmatpush1.msra.mxu0 0.0
    %904 = vmatprep.subr.mxu0 0.0
    %905 = vmatpush1.msra.mxu0 0.0
    %906 = vmatprep.subr.mxu0 0.0
    %907 = vmatpush1.msra.mxu0 0.0
    %908 = vmatprep.subr.mxu0 0.0
    %909 = vmatpush1.msra.mxu0 0.0
    %910 = vmatprep.subr.mxu0 0.0
    %911 = vmatpush1.msra.mxu0 0.0
    %912 = vmatprep.subr.mxu0 0.0
    %913 = vmatpush1.msra.mxu0 0.0
    %914 = vmatprep.subr.mxu0 0.0
    %915 = vmatpush1.msra.mxu0 0.0
    %916 = vmatprep.subr.mxu0 0.0
    %917 = vmatpush1.msra.mxu0 0.0
    %918 = vmatprep.subr.mxu0 0.0
    %919 = vmatpush1.msra.mxu0 0.0
    %920 = vmatprep.subr.mxu0 0.0
    %921 = vmatpush1.msra.mxu0 0.0
    %922 = vmatprep.subr.mxu0 0.0
    %923 = vmatpush1.msra.mxu0 0.0
    %924 = vmatprep.mubr.f32.mxu0 0.0
    %925 = vmatmul.mubr.f32.gmra.mrb[0].mxu0 %v849
    %v926 = vpop.f32.mrb[0].mxu0
    %v927 = vadd.f32 %v846, %v926
    %v928 = vpop.f32.mrb[0].mxu0
    %929 = vmatprep.mubr.f32.mxu0 0.0
    %930 = vmatmul.mubr.f32.gmra.mrb[0].mxu0 %v852
    %v931 = vpop.f32.mrb[0].mxu0
    %v932 = vadd.f32 %v846, %v931
    %v933 = vpop.f32.mrb[0].mxu0
    %934 = vmatprep.mubr.f32.mxu0 0.0
    %935 = vmatmul.mubr.f32.gmra.mrb[0].mxu0 %v855
    %v936 = vpop.f32.mrb[0].mxu0
    %v937 = vadd.f32 %v846, %v936
    %v938 = vpop.f32.mrb[0].mxu0
    %939 = vmatprep.mubr.f32.mxu0 0.0
    %940 = vmatmul.mubr.f32.gmra.mrb[0].mxu0 %v858
    %v941 = vpop.f32.mrb[0].mxu0
    %v942 = vadd.f32 %v846, %v941
    %v943 = vpop.f32.mrb[0].mxu0
    %944 = vdwg.mxu0
    %s945 = scalar_lea.vmem %s7, 1
    %v946 = vld [vmem:[%s945] sm:$0x1]
    %s947 = scalar_lea.vmem %s8, 1
    %v948 = vld [vmem:[%s947] sm:$0x1]
    %v949 = vsel %vm33, %v927, 0.0
    %950 = vadd.xlane.f32.xlu0 %v949
    %v951 = vpop.xlane.xlu0 %950
    %v952 = vsel %vm33, %v932, 0.0
    %953 = vadd.xlane.f32.xlu0 %v952
    %v954 = vpop.xlane.xlu0 %953
    %v955 = vsel %vm33, %v937, 0.0
    %956 = vadd.xlane.f32.xlu0 %v955
    %v957 = vpop.xlane.xlu0 %956
    %v958 = vsel %vm33, %v942, 0.0
    %959 = vadd.xlane.f32.xlu0 %v958
    %v960 = vpop.xlane.xlu0 %959
    %v961 = vmul.f32 %v951, %v230
    %v962 = vmul.f32 %v954, %v230
    %v963 = vmul.f32 %v957, %v230
    %v964 = vmul.f32 %v960, %v230
    %v965 = vsub.f32 %v927, %v961
    %v966 = vsub.f32 %v932, %v962
    %v967 = vsub.f32 %v937, %v963
    %v968 = vsub.f32 %v942, %v964
    %v969 = vmul.f32 %v965, %v965
    %v970 = vmul.f32 %v966, %v966
    %v971 = vmul.f32 %v967, %v967
    %v972 = vmul.f32 %v968, %v968
    %v973 = vsel %vm33, %v969, 0.0
    %974 = vadd.xlane.f32.xlu0 %v973
    %v975 = vpop.xlane.xlu0 %974
    %v976 = vsel %vm33, %v970, 0.0
    %977 = vadd.xlane.f32.xlu0 %v976
    %v978 = vpop.xlane.xlu0 %977
    %v979 = vsel %vm33, %v971, 0.0
    %980 = vadd.xlane.f32.xlu0 %v979
    %v981 = vpop.xlane.xlu0 %980
    %v982 = vsel %vm33, %v972, 0.0
    %983 = vadd.xlane.f32.xlu0 %v982
    %v984 = vpop.xlane.xlu0 %983
    %v985 = vmul.f32 %v975, %v230
    %v986 = vmul.f32 %v978, %v230
    %v987 = vmul.f32 %v981, %v230
    %v988 = vmul.f32 %v984, %v230
    %v989 = vadd.f32 %v985, 1e-08
    %v990 = vadd.f32 %v986, 1e-08
    %v991 = vadd.f32 %v987, 1e-08
    %v992 = vadd.f32 %v988, 1e-08
    %v993 = vrsqrt.pop %v989
    %v994 = vrsqrt.pop %v990
    %v995 = vrsqrt.pop %v991
    %v996 = vrsqrt.pop %v992
    %v997 = vmul.f32 %v965, %v993
    %v998 = vmul.f32 %v966, %v994
    %v999 = vmul.f32 %v967, %v995
    %v1000 = vmul.f32 %v968, %v996
    %v1002 = vlaneseq
    %v1003 = vshrl.u32 %v1002, 7
    %v1004 = vsub.s32 0, %v1003
    %v1005 = vrot.slane %v946, %v1004
    %v1007 = vmul.f32 %v997, %v1005
    %v1008 = vmul.f32 %v998, %v1005
    %v1009 = vmul.f32 %v999, %v1005
    %v1010 = vmul.f32 %v1000, %v1005
    %v1012 = vlaneseq
    %v1013 = vshrl.u32 %v1012, 7
    %v1014 = vsub.s32 0, %v1013
    %v1015 = vrot.slane %v948, %v1014
    %v1017 = vadd.f32 %v1007, %v1015
    %v1018 = vadd.f32 %v1008, %v1015
    %v1019 = vadd.f32 %v1009, %v1015
    %v1020 = vadd.f32 %v1010, %v1015
    %v1021 = vmax.f32 %v1017, 0.0
    %v1022 = vmax.f32 %v1018, 0.0
    %v1023 = vmax.f32 %v1019, 0.0
    %v1024 = vmax.f32 %v1020, 0.0
    %v1025 = vadd.f32 %v1021, %v545
    %v1026 = vadd.f32 %v1022, %v546
    %v1027 = vadd.f32 %v1023, %v547
    %v1028 = vadd.f32 %v1024, %v548
    %s1029 = scalar_lea.vmem %s1, 192
    %v1030 = vld [vmem:[%s1029] sm:$0xff]
    %v1031 = vld [vmem:[%s1029 + $0x8] sm:$0xff]
    %v1032 = vld [vmem:[%s1029 + $0x10] sm:$0xff]
    %v1033 = vld [vmem:[%s1029 + $0x18] sm:$0xff]
    %v1034 = vld [vmem:[%s1029 + $0x20] sm:$0xff]
    %v1035 = vld [vmem:[%s1029 + $0x28] sm:$0xff]
    %v1036 = vld [vmem:[%s1029 + $0x30] sm:$0xff]
    %v1037 = vld [vmem:[%s1029 + $0x38] sm:$0xff]
    %v1038 = vld [vmem:[%s1029 + $0x40] sm:$0xff]
    %v1039 = vld [vmem:[%s1029 + $0x48] sm:$0xff]
    %v1040 = vld [vmem:[%s1029 + $0x50] sm:$0xff]
    %v1041 = vld [vmem:[%s1029 + $0x58] sm:$0xff]
    %s1042 = scalar_lea.vmem %s2, 2
    %v1043 = vld [vmem:[%s1042] sm:$0x1]
    %1044 = vst.msk [vmem:[#allocation2 + $0x10] sm:$0xff] %vm33, %v1025
    %1045 = vst.msk [vmem:[#allocation2 + $0x18] sm:$0xff] %vm33, %v1026
    %1046 = vst.msk [vmem:[#allocation2 + $0x30] sm:$0xff] %vm33, %v1027
    %1047 = vst.msk [vmem:[#allocation2 + $0x38] sm:$0xff] %vm33, %v1028
    %v1048 = vld [vmem:[#allocation2 + $0xe] sm:$0xff]
    %v1049 = vld [vmem:[#allocation2 + $0x16] sm:$0xff]
    %v1050 = vld [vmem:[#allocation2 + $0x2e] sm:$0xff]
    %v1051 = vld [vmem:[#allocation2 + $0x36] sm:$0xff]
    %v1052 = vld [vmem:[#allocation2 + $0xf] sm:$0xff]
    %v1053 = vld [vmem:[#allocation2 + $0x17] sm:$0xff]
    %v1054 = vld [vmem:[#allocation2 + $0x2f] sm:$0xff]
    %v1055 = vld [vmem:[#allocation2 + $0x37] sm:$0xff]
    %v1056 = vld [vmem:[#allocation2 + $0x10] sm:$0xff]
    %v1057 = vld [vmem:[#allocation2 + $0x18] sm:$0xff]
    %v1058 = vld [vmem:[#allocation2 + $0x30] sm:$0xff]
    %v1059 = vld [vmem:[#allocation2 + $0x38] sm:$0xff]
    %1064 = vrot.lane.b32.xlu0 %v1052, 32
    %v1065 = vpop.permute.xlu0 %1064
    %1066 = vrot.lane.b32.xlu0 %v1053, 32
    %v1067 = vpop.permute.xlu0 %1066
    %1068 = vrot.lane.b32.xlu0 %v1054, 32
    %v1069 = vpop.permute.xlu0 %1068
    %1070 = vrot.lane.b32.xlu0 %v1055, 32
    %v1071 = vpop.permute.xlu0 %1070
    %1080 = vrot.lane.b32.xlu0 %v1056, 64
    %v1081 = vpop.permute.xlu0 %1080
    %1082 = vrot.lane.b32.xlu0 %v1057, 64
    %v1083 = vpop.permute.xlu0 %1082
    %1084 = vrot.lane.b32.xlu0 %v1058, 64
    %v1085 = vpop.permute.xlu0 %1084
    %1086 = vrot.lane.b32.xlu0 %v1059, 64
    %v1087 = vpop.permute.xlu0 %1086
    %v1092 = vsel %vm33, %v1048, %v1065
    %v1093 = vsel %vm33, %v1049, %v1067
    %v1094 = vsel %vm33, %v1050, %v1069
    %v1095 = vsel %vm33, %v1051, %v1071
    %v1096 = vsel %vm107, %v1092, %v1081
    %v1097 = vsel %vm107, %v1093, %v1083
    %v1098 = vsel %vm107, %v1094, %v1085
    %v1099 = vsel %vm107, %v1095, %v1087
    %v1101 = vlaneseq
    %v1102 = vshrl.u32 %v1101, 7
    %v1103 = vsub.s32 0, %v1102
    %v1104 = vrot.slane %v1043, %v1103
    %v1107 = vsel %vm118, %v1096, 0
    %v1110 = vsel %vm118, %v1097, 0
    %v1113 = vsel %vm118, %v1098, 0
    %v1116 = vsel %vm118, %v1099, 0
    %1118 = vmatprep.subr.mxu0 0.0
    %1119 = vmatpush1.msra.mxu0 %v1030
    %1120 = vmatprep.subr.mxu0 0.0
    %1121 = vmatpush1.msra.mxu0 %v1031
    %1122 = vmatprep.subr.mxu0 0.0
    %1123 = vmatpush1.msra.mxu0 %v1032
    %1124 = vmatprep.subr.mxu0 0.0
    %1125 = vmatpush1.msra.mxu0 %v1033
    %1126 = vmatprep.subr.mxu0 0.0
    %1127 = vmatpush1.msra.mxu0 %v1034
    %1128 = vmatprep.subr.mxu0 0.0
    %1129 = vmatpush1.msra.mxu0 %v1035
    %1130 = vmatprep.subr.mxu0 0.0
    %1131 = vmatpush1.msra.mxu0 %v1036
    %1132 = vmatprep.subr.mxu0 0.0
    %1133 = vmatpush1.msra.mxu0 %v1037
    %1134 = vmatprep.subr.mxu0 0.0
    %1135 = vmatpush1.msra.mxu0 %v1038
    %1136 = vmatprep.subr.mxu0 0.0
    %1137 = vmatpush1.msra.mxu0 %v1039
    %1138 = vmatprep.subr.mxu0 0.0
    %1139 = vmatpush1.msra.mxu0 %v1040
    %1140 = vmatprep.subr.mxu0 0.0
    %1141 = vmatpush1.msra.mxu0 %v1041
    %1142 = vmatprep.subr.mxu0 0.0
    %1143 = vmatpush1.msra.mxu0 0.0
    %1144 = vmatprep.subr.mxu0 0.0
    %1145 = vmatpush1.msra.mxu0 0.0
    %1146 = vmatprep.subr.mxu0 0.0
    %1147 = vmatpush1.msra.mxu0 0.0
    %1148 = vmatprep.subr.mxu0 0.0
    %1149 = vmatpush1.msra.mxu0 0.0
    %1150 = vmatprep.subr.mxu0 0.0
    %1151 = vmatpush1.msra.mxu0 0.0
    %1152 = vmatprep.subr.mxu0 0.0
    %1153 = vmatpush1.msra.mxu0 0.0
    %1154 = vmatprep.subr.mxu0 0.0
    %1155 = vmatpush1.msra.mxu0 0.0
    %1156 = vmatprep.subr.mxu0 0.0
    %1157 = vmatpush1.msra.mxu0 0.0
    %1158 = vmatprep.subr.mxu0 0.0
    %1159 = vmatpush1.msra.mxu0 0.0
    %1160 = vmatprep.subr.mxu0 0.0
    %1161 = vmatpush1.msra.mxu0 0.0
    %1162 = vmatprep.subr.mxu0 0.0
    %1163 = vmatpush1.msra.mxu0 0.0
    %1164 = vmatprep.subr.mxu0 0.0
    %1165 = vmatpush1.msra.mxu0 0.0
    %1166 = vmatprep.subr.mxu0 0.0
    %1167 = vmatpush1.msra.mxu0 0.0
    %1168 = vmatprep.subr.mxu0 0.0
    %1169 = vmatpush1.msra.mxu0 0.0
    %1170 = vmatprep.subr.mxu0 0.0
    %1171 = vmatpush1.msra.mxu0 0.0
    %1172 = vmatprep.subr.mxu0 0.0
    %1173 = vmatpush1.msra.mxu0 0.0
    %1174 = vmatprep.subr.mxu0 0.0
    %1175 = vmatpush1.msra.mxu0 0.0
    %1176 = vmatprep.subr.mxu0 0.0
    %1177 = vmatpush1.msra.mxu0 0.0
    %1178 = vmatprep.subr.mxu0 0.0
    %1179 = vmatpush1.msra.mxu0 0.0
    %1180 = vmatprep.subr.mxu0 0.0
    %1181 = vmatpush1.msra.mxu0 0.0
    %1182 = vmatprep.mubr.f32.mxu0 0.0
    %1183 = vmatmul.mubr.f32.gmra.mrb[0].mxu0 %v1107
    %v1184 = vpop.f32.mrb[0].mxu0
    %v1185 = vadd.f32 %v1104, %v1184
    %v1186 = vpop.f32.mrb[0].mxu0
    %1187 = vmatprep.mubr.f32.mxu0 0.0
    %1188 = vmatmul.mubr.f32.gmra.mrb[0].mxu0 %v1110
    %v1189 = vpop.f32.mrb[0].mxu0
    %v1190 = vadd.f32 %v1104, %v1189
    %v1191 = vpop.f32.mrb[0].mxu0
    %1192 = vmatprep.mubr.f32.mxu0 0.0
    %1193 = vmatmul.mubr.f32.gmra.mrb[0].mxu0 %v1113
    %v1194 = vpop.f32.mrb[0].mxu0
    %v1195 = vadd.f32 %v1104, %v1194
    %v1196 = vpop.f32.mrb[0].mxu0
    %1197 = vmatprep.mubr.f32.mxu0 0.0
    %1198 = vmatmul.mubr.f32.gmra.mrb[0].mxu0 %v1116
    %v1199 = vpop.f32.mrb[0].mxu0
    %v1200 = vadd.f32 %v1104, %v1199
    %v1201 = vpop.f32.mrb[0].mxu0
    %1202 = vdwg.mxu0
    %s1203 = scalar_lea.vmem %s3, 2
    %v1204 = vld [vmem:[%s1203] sm:$0x1]
    %s1205 = scalar_lea.vmem %s4, 2
    %v1206 = vld [vmem:[%s1205] sm:$0x1]
    %v1207 = vsel %vm33, %v1185, 0.0
    %1208 = vadd.xlane.f32.xlu0 %v1207
    %v1209 = vpop.xlane.xlu0 %1208
    %v1210 = vsel %vm33, %v1190, 0.0
    %1211 = vadd.xlane.f32.xlu0 %v1210
    %v1212 = vpop.xlane.xlu0 %1211
    %v1213 = vsel %vm33, %v1195, 0.0
    %1214 = vadd.xlane.f32.xlu0 %v1213
    %v1215 = vpop.xlane.xlu0 %1214
    %v1216 = vsel %vm33, %v1200, 0.0
    %1217 = vadd.xlane.f32.xlu0 %v1216
    %v1218 = vpop.xlane.xlu0 %1217
    %v1219 = vmul.f32 %v1209, %v230
    %v1220 = vmul.f32 %v1212, %v230
    %v1221 = vmul.f32 %v1215, %v230
    %v1222 = vmul.f32 %v1218, %v230
    %v1223 = vsub.f32 %v1185, %v1219
    %v1224 = vsub.f32 %v1190, %v1220
    %v1225 = vsub.f32 %v1195, %v1221
    %v1226 = vsub.f32 %v1200, %v1222
    %v1227 = vmul.f32 %v1223, %v1223
    %v1228 = vmul.f32 %v1224, %v1224
    %v1229 = vmul.f32 %v1225, %v1225
    %v1230 = vmul.f32 %v1226, %v1226
    %v1231 = vsel %vm33, %v1227, 0.0
    %1232 = vadd.xlane.f32.xlu0 %v1231
    %v1233 = vpop.xlane.xlu0 %1232
    %v1234 = vsel %vm33, %v1228, 0.0
    %1235 = vadd.xlane.f32.xlu0 %v1234
    %v1236 = vpop.xlane.xlu0 %1235
    %v1237 = vsel %vm33, %v1229, 0.0
    %1238 = vadd.xlane.f32.xlu0 %v1237
    %v1239 = vpop.xlane.xlu0 %1238
    %v1240 = vsel %vm33, %v1230, 0.0
    %1241 = vadd.xlane.f32.xlu0 %v1240
    %v1242 = vpop.xlane.xlu0 %1241
    %v1243 = vmul.f32 %v1233, %v230
    %v1244 = vmul.f32 %v1236, %v230
    %v1245 = vmul.f32 %v1239, %v230
    %v1246 = vmul.f32 %v1242, %v230
    %v1247 = vadd.f32 %v1243, 1e-08
    %v1248 = vadd.f32 %v1244, 1e-08
    %v1249 = vadd.f32 %v1245, 1e-08
    %v1250 = vadd.f32 %v1246, 1e-08
    %v1251 = vrsqrt.pop %v1247
    %v1252 = vrsqrt.pop %v1248
    %v1253 = vrsqrt.pop %v1249
    %v1254 = vrsqrt.pop %v1250
    %v1255 = vmul.f32 %v1223, %v1251
    %v1256 = vmul.f32 %v1224, %v1252
    %v1257 = vmul.f32 %v1225, %v1253
    %v1258 = vmul.f32 %v1226, %v1254
    %v1260 = vlaneseq
    %v1261 = vshrl.u32 %v1260, 7
    %v1262 = vsub.s32 0, %v1261
    %v1263 = vrot.slane %v1204, %v1262
    %v1265 = vmul.f32 %v1255, %v1263
    %v1266 = vmul.f32 %v1256, %v1263
    %v1267 = vmul.f32 %v1257, %v1263
    %v1268 = vmul.f32 %v1258, %v1263
    %v1270 = vlaneseq
    %v1271 = vshrl.u32 %v1270, 7
    %v1272 = vsub.s32 0, %v1271
    %v1273 = vrot.slane %v1206, %v1272
    %v1275 = vadd.f32 %v1265, %v1273
    %v1276 = vadd.f32 %v1266, %v1273
    %v1277 = vadd.f32 %v1267, %v1273
    %v1278 = vadd.f32 %v1268, %v1273
    %v1279 = vmax.f32 %v1275, 0.0
    %v1280 = vmax.f32 %v1276, 0.0
    %v1281 = vmax.f32 %v1277, 0.0
    %v1282 = vmax.f32 %v1278, 0.0
    %s1283 = scalar_lea.vmem %s5, 192
    %v1284 = vld [vmem:[%s1283] sm:$0xff]
    %v1285 = vld [vmem:[%s1283 + $0x8] sm:$0xff]
    %v1286 = vld [vmem:[%s1283 + $0x10] sm:$0xff]
    %v1287 = vld [vmem:[%s1283 + $0x18] sm:$0xff]
    %v1288 = vld [vmem:[%s1283 + $0x20] sm:$0xff]
    %v1289 = vld [vmem:[%s1283 + $0x28] sm:$0xff]
    %v1290 = vld [vmem:[%s1283 + $0x30] sm:$0xff]
    %v1291 = vld [vmem:[%s1283 + $0x38] sm:$0xff]
    %v1292 = vld [vmem:[%s1283 + $0x40] sm:$0xff]
    %v1293 = vld [vmem:[%s1283 + $0x48] sm:$0xff]
    %v1294 = vld [vmem:[%s1283 + $0x50] sm:$0xff]
    %v1295 = vld [vmem:[%s1283 + $0x58] sm:$0xff]
    %s1296 = scalar_lea.vmem %s6, 2
    %v1297 = vld [vmem:[%s1296] sm:$0x1]
    %1298 = vst.msk [vmem:[#allocation2 + $0x10] sm:$0xff] %vm33, %v1279
    %1299 = vst.msk [vmem:[#allocation2 + $0x18] sm:$0xff] %vm33, %v1280
    %1300 = vst.msk [vmem:[#allocation2 + $0x30] sm:$0xff] %vm33, %v1281
    %1301 = vst.msk [vmem:[#allocation2 + $0x38] sm:$0xff] %vm33, %v1282
    %v1302 = vld [vmem:[#allocation2 + $0xc] sm:$0xff]
    %v1303 = vld [vmem:[#allocation2 + $0x14] sm:$0xff]
    %v1304 = vld [vmem:[#allocation2 + $0x2c] sm:$0xff]
    %v1305 = vld [vmem:[#allocation2 + $0x34] sm:$0xff]
    %v1306 = vld [vmem:[#allocation2 + $0xe] sm:$0xff]
    %v1307 = vld [vmem:[#allocation2 + $0x16] sm:$0xff]
    %v1308 = vld [vmem:[#allocation2 + $0x2e] sm:$0xff]
    %v1309 = vld [vmem:[#allocation2 + $0x36] sm:$0xff]
    %v1310 = vld [vmem:[#allocation2 + $0x10] sm:$0xff]
    %v1311 = vld [vmem:[#allocation2 + $0x18] sm:$0xff]
    %v1312 = vld [vmem:[#allocation2 + $0x30] sm:$0xff]
    %v1313 = vld [vmem:[#allocation2 + $0x38] sm:$0xff]
    %1318 = vrot.lane.b32.xlu0 %v1306, 32
    %v1319 = vpop.permute.xlu0 %1318
    %1320 = vrot.lane.b32.xlu0 %v1307, 32
    %v1321 = vpop.permute.xlu0 %1320
    %1322 = vrot.lane.b32.xlu0 %v1308, 32
    %v1323 = vpop.permute.xlu0 %1322
    %1324 = vrot.lane.b32.xlu0 %v1309, 32
    %v1325 = vpop.permute.xlu0 %1324
    %1334 = vrot.lane.b32.xlu0 %v1310, 64
    %v1335 = vpop.permute.xlu0 %1334
    %1336 = vrot.lane.b32.xlu0 %v1311, 64
    %v1337 = vpop.permute.xlu0 %1336
    %1338 = vrot.lane.b32.xlu0 %v1312, 64
    %v1339 = vpop.permute.xlu0 %1338
    %1340 = vrot.lane.b32.xlu0 %v1313, 64
    %v1341 = vpop.permute.xlu0 %1340
    %v1346 = vsel %vm33, %v1302, %v1319
    %v1347 = vsel %vm33, %v1303, %v1321
    %v1348 = vsel %vm33, %v1304, %v1323
    %v1349 = vsel %vm33, %v1305, %v1325
    %v1350 = vsel %vm107, %v1346, %v1335
    %v1351 = vsel %vm107, %v1347, %v1337
    %v1352 = vsel %vm107, %v1348, %v1339
    %v1353 = vsel %vm107, %v1349, %v1341
    %v1355 = vlaneseq
    %v1356 = vshrl.u32 %v1355, 7
    %v1357 = vsub.s32 0, %v1356
    %v1358 = vrot.slane %v1297, %v1357
    %v1361 = vsel %vm118, %v1350, 0
    %v1364 = vsel %vm118, %v1351, 0
    %v1367 = vsel %vm118, %v1352, 0
    %v1370 = vsel %vm118, %v1353, 0
    %1372 = vmatprep.subr.mxu0 0.0
    %1373 = vmatpush1.msra.mxu0 %v1284
    %1374 = vmatprep.subr.mxu0 0.0
    %1375 = vmatpush1.msra.mxu0 %v1285
    %1376 = vmatprep.subr.mxu0 0.0
    %1377 = vmatpush1.msra.mxu0 %v1286
    %1378 = vmatprep.subr.mxu0 0.0
    %1379 = vmatpush1.msra.mxu0 %v1287
    %1380 = vmatprep.subr.mxu0 0.0
    %1381 = vmatpush1.msra.mxu0 %v1288
    %1382 = vmatprep.subr.mxu0 0.0
    %1383 = vmatpush1.msra.mxu0 %v1289
    %1384 = vmatprep.subr.mxu0 0.0
    %1385 = vmatpush1.msra.mxu0 %v1290
    %1386 = vmatprep.subr.mxu0 0.0
    %1387 = vmatpush1.msra.mxu0 %v1291
    %1388 = vmatprep.subr.mxu0 0.0
    %1389 = vmatpush1.msra.mxu0 %v1292
    %1390 = vmatprep.subr.mxu0 0.0
    %1391 = vmatpush1.msra.mxu0 %v1293
    %1392 = vmatprep.subr.mxu0 0.0
    %1393 = vmatpush1.msra.mxu0 %v1294
    %1394 = vmatprep.subr.mxu0 0.0
    %1395 = vmatpush1.msra.mxu0 %v1295
    %1396 = vmatprep.subr.mxu0 0.0
    %1397 = vmatpush1.msra.mxu0 0.0
    %1398 = vmatprep.subr.mxu0 0.0
    %1399 = vmatpush1.msra.mxu0 0.0
    %1400 = vmatprep.subr.mxu0 0.0
    %1401 = vmatpush1.msra.mxu0 0.0
    %1402 = vmatprep.subr.mxu0 0.0
    %1403 = vmatpush1.msra.mxu0 0.0
    %1404 = vmatprep.subr.mxu0 0.0
    %1405 = vmatpush1.msra.mxu0 0.0
    %1406 = vmatprep.subr.mxu0 0.0
    %1407 = vmatpush1.msra.mxu0 0.0
    %1408 = vmatprep.subr.mxu0 0.0
    %1409 = vmatpush1.msra.mxu0 0.0
    %1410 = vmatprep.subr.mxu0 0.0
    %1411 = vmatpush1.msra.mxu0 0.0
    %1412 = vmatprep.subr.mxu0 0.0
    %1413 = vmatpush1.msra.mxu0 0.0
    %1414 = vmatprep.subr.mxu0 0.0
    %1415 = vmatpush1.msra.mxu0 0.0
    %1416 = vmatprep.subr.mxu0 0.0
    %1417 = vmatpush1.msra.mxu0 0.0
    %1418 = vmatprep.subr.mxu0 0.0
    %1419 = vmatpush1.msra.mxu0 0.0
    %1420 = vmatprep.subr.mxu0 0.0
    %1421 = vmatpush1.msra.mxu0 0.0
    %1422 = vmatprep.subr.mxu0 0.0
    %1423 = vmatpush1.msra.mxu0 0.0
    %1424 = vmatprep.subr.mxu0 0.0
    %1425 = vmatpush1.msra.mxu0 0.0
    %1426 = vmatprep.subr.mxu0 0.0
    %1427 = vmatpush1.msra.mxu0 0.0
    %1428 = vmatprep.subr.mxu0 0.0
    %1429 = vmatpush1.msra.mxu0 0.0
    %1430 = vmatprep.subr.mxu0 0.0
    %1431 = vmatpush1.msra.mxu0 0.0
    %1432 = vmatprep.subr.mxu0 0.0
    %1433 = vmatpush1.msra.mxu0 0.0
    %1434 = vmatprep.subr.mxu0 0.0
    %1435 = vmatpush1.msra.mxu0 0.0
    %1436 = vmatprep.mubr.f32.mxu0 0.0
    %1437 = vmatmul.mubr.f32.gmra.mrb[0].mxu0 %v1361
    %v1438 = vpop.f32.mrb[0].mxu0
    %v1439 = vadd.f32 %v1358, %v1438
    %v1440 = vpop.f32.mrb[0].mxu0
    %1441 = vmatprep.mubr.f32.mxu0 0.0
    %1442 = vmatmul.mubr.f32.gmra.mrb[0].mxu0 %v1364
    %v1443 = vpop.f32.mrb[0].mxu0
    %v1444 = vadd.f32 %v1358, %v1443
    %v1445 = vpop.f32.mrb[0].mxu0
    %1446 = vmatprep.mubr.f32.mxu0 0.0
    %1447 = vmatmul.mubr.f32.gmra.mrb[0].mxu0 %v1367
    %v1448 = vpop.f32.mrb[0].mxu0
    %v1449 = vadd.f32 %v1358, %v1448
    %v1450 = vpop.f32.mrb[0].mxu0
    %1451 = vmatprep.mubr.f32.mxu0 0.0
    %1452 = vmatmul.mubr.f32.gmra.mrb[0].mxu0 %v1370
    %v1453 = vpop.f32.mrb[0].mxu0
    %v1454 = vadd.f32 %v1358, %v1453
    %v1455 = vpop.f32.mrb[0].mxu0
    %1456 = vdwg.mxu0
    %s1457 = scalar_lea.vmem %s7, 2
    %v1458 = vld [vmem:[%s1457] sm:$0x1]
    %s1459 = scalar_lea.vmem %s8, 2
    %v1460 = vld [vmem:[%s1459] sm:$0x1]
    %v1461 = vsel %vm33, %v1439, 0.0
    %1462 = vadd.xlane.f32.xlu0 %v1461
    %v1463 = vpop.xlane.xlu0 %1462
    %v1464 = vsel %vm33, %v1444, 0.0
    %1465 = vadd.xlane.f32.xlu0 %v1464
    %v1466 = vpop.xlane.xlu0 %1465
    %v1467 = vsel %vm33, %v1449, 0.0
    %1468 = vadd.xlane.f32.xlu0 %v1467
    %v1469 = vpop.xlane.xlu0 %1468
    %v1470 = vsel %vm33, %v1454, 0.0
    %1471 = vadd.xlane.f32.xlu0 %v1470
    %v1472 = vpop.xlane.xlu0 %1471
    %v1473 = vmul.f32 %v1463, %v230
    %v1474 = vmul.f32 %v1466, %v230
    %v1475 = vmul.f32 %v1469, %v230
    %v1476 = vmul.f32 %v1472, %v230
    %v1477 = vsub.f32 %v1439, %v1473
    %v1478 = vsub.f32 %v1444, %v1474
    %v1479 = vsub.f32 %v1449, %v1475
    %v1480 = vsub.f32 %v1454, %v1476
    %v1481 = vmul.f32 %v1477, %v1477
    %v1482 = vmul.f32 %v1478, %v1478
    %v1483 = vmul.f32 %v1479, %v1479
    %v1484 = vmul.f32 %v1480, %v1480
    %v1485 = vsel %vm33, %v1481, 0.0
    %1486 = vadd.xlane.f32.xlu0 %v1485
    %v1487 = vpop.xlane.xlu0 %1486
    %v1488 = vsel %vm33, %v1482, 0.0
    %1489 = vadd.xlane.f32.xlu0 %v1488
    %v1490 = vpop.xlane.xlu0 %1489
    %v1491 = vsel %vm33, %v1483, 0.0
    %1492 = vadd.xlane.f32.xlu0 %v1491
    %v1493 = vpop.xlane.xlu0 %1492
    %v1494 = vsel %vm33, %v1484, 0.0
    %1495 = vadd.xlane.f32.xlu0 %v1494
    %v1496 = vpop.xlane.xlu0 %1495
    %v1497 = vmul.f32 %v1487, %v230
    %v1498 = vmul.f32 %v1490, %v230
    %v1499 = vmul.f32 %v1493, %v230
    %v1500 = vmul.f32 %v1496, %v230
    %v1501 = vadd.f32 %v1497, 1e-08
    %v1502 = vadd.f32 %v1498, 1e-08
    %v1503 = vadd.f32 %v1499, 1e-08
    %v1504 = vadd.f32 %v1500, 1e-08
    %v1505 = vrsqrt.pop %v1501
    %v1506 = vrsqrt.pop %v1502
    %v1507 = vrsqrt.pop %v1503
    %v1508 = vrsqrt.pop %v1504
    %v1509 = vmul.f32 %v1477, %v1505
    %v1510 = vmul.f32 %v1478, %v1506
    %v1511 = vmul.f32 %v1479, %v1507
    %v1512 = vmul.f32 %v1480, %v1508
    %v1514 = vlaneseq
    %v1515 = vshrl.u32 %v1514, 7
    %v1516 = vsub.s32 0, %v1515
    %v1517 = vrot.slane %v1458, %v1516
    %v1519 = vmul.f32 %v1509, %v1517
    %v1520 = vmul.f32 %v1510, %v1517
    %v1521 = vmul.f32 %v1511, %v1517
    %v1522 = vmul.f32 %v1512, %v1517
    %v1524 = vlaneseq
    %v1525 = vshrl.u32 %v1524, 7
    %v1526 = vsub.s32 0, %v1525
    %v1527 = vrot.slane %v1460, %v1526
    %v1529 = vadd.f32 %v1519, %v1527
    %v1530 = vadd.f32 %v1520, %v1527
    %v1531 = vadd.f32 %v1521, %v1527
    %v1532 = vadd.f32 %v1522, %v1527
    %v1533 = vmax.f32 %v1529, 0.0
    %v1534 = vmax.f32 %v1530, 0.0
    %v1535 = vmax.f32 %v1531, 0.0
    %v1536 = vmax.f32 %v1532, 0.0
    %v1537 = vadd.f32 %v1533, %v1025
    %v1538 = vadd.f32 %v1534, %v1026
    %v1539 = vadd.f32 %v1535, %v1027
    %v1540 = vadd.f32 %v1536, %v1028
    %s1541 = scalar_lea.vmem %s1, 288
    %v1542 = vld [vmem:[%s1541] sm:$0xff]
    %v1543 = vld [vmem:[%s1541 + $0x8] sm:$0xff]
    %v1544 = vld [vmem:[%s1541 + $0x10] sm:$0xff]
    %v1545 = vld [vmem:[%s1541 + $0x18] sm:$0xff]
    %v1546 = vld [vmem:[%s1541 + $0x20] sm:$0xff]
    %v1547 = vld [vmem:[%s1541 + $0x28] sm:$0xff]
    %v1548 = vld [vmem:[%s1541 + $0x30] sm:$0xff]
    %v1549 = vld [vmem:[%s1541 + $0x38] sm:$0xff]
    %v1550 = vld [vmem:[%s1541 + $0x40] sm:$0xff]
    %v1551 = vld [vmem:[%s1541 + $0x48] sm:$0xff]
    %v1552 = vld [vmem:[%s1541 + $0x50] sm:$0xff]
    %v1553 = vld [vmem:[%s1541 + $0x58] sm:$0xff]
    %s1554 = scalar_lea.vmem %s2, 3
    %v1555 = vld [vmem:[%s1554] sm:$0x1]
    %1556 = vst.msk [vmem:[#allocation2 + $0x10] sm:$0xff] %vm33, %v1537
    %1557 = vst.msk [vmem:[#allocation2 + $0x18] sm:$0xff] %vm33, %v1538
    %1558 = vst.msk [vmem:[#allocation2 + $0x30] sm:$0xff] %vm33, %v1539
    %1559 = vst.msk [vmem:[#allocation2 + $0x38] sm:$0xff] %vm33, %v1540
    %v1560 = vld [vmem:[#allocation2 + $0x8] sm:$0xff]
    %v1561 = vld [vmem:[#allocation2 + $0x10] sm:$0xff]
    %v1562 = vld [vmem:[#allocation2 + $0x28] sm:$0xff]
    %v1563 = vld [vmem:[#allocation2 + $0x30] sm:$0xff]
    %v1564 = vld [vmem:[#allocation2 + $0xc] sm:$0xff]
    %v1565 = vld [vmem:[#allocation2 + $0x14] sm:$0xff]
    %v1566 = vld [vmem:[#allocation2 + $0x2c] sm:$0xff]
    %v1567 = vld [vmem:[#allocation2 + $0x34] sm:$0xff]
    %v1568 = vld [vmem:[#allocation2 + $0x18] sm:$0xff]
    %v1569 = vld [vmem:[#allocation2 + $0x38] sm:$0xff]
    %1574 = vrot.lane.b32.xlu0 %v1564, 32
    %v1575 = vpop.permute.xlu0 %1574
    %1576 = vrot.lane.b32.xlu0 %v1565, 32
    %v1577 = vpop.permute.xlu0 %1576
    %1578 = vrot.lane.b32.xlu0 %v1566, 32
    %v1579 = vpop.permute.xlu0 %1578
    %1580 = vrot.lane.b32.xlu0 %v1567, 32
    %v1581 = vpop.permute.xlu0 %1580
    %1590 = vrot.lane.b32.xlu0 %v1561, 64
    %v1591 = vpop.permute.xlu0 %1590
    %1592 = vrot.lane.b32.xlu0 %v1568, 64
    %v1593 = vpop.permute.xlu0 %1592
    %1594 = vrot.lane.b32.xlu0 %v1563, 64
    %v1595 = vpop.permute.xlu0 %1594
    %1596 = vrot.lane.b32.xlu0 %v1569, 64
    %v1597 = vpop.permute.xlu0 %1596
    %v1602 = vsel %vm33, %v1560, %v1575
    %v1603 = vsel %vm33, %v1561, %v1577
    %v1604 = vsel %vm33, %v1562, %v1579
    %v1605 = vsel %vm33, %v1563, %v1581
    %v1606 = vsel %vm107, %v1602, %v1591
    %v1607 = vsel %vm107, %v1603, %v1593
    %v1608 = vsel %vm107, %v1604, %v1595
    %v1609 = vsel %vm107, %v1605, %v1597
    %v1611 = vlaneseq
    %v1612 = vshrl.u32 %v1611, 7
    %v1613 = vsub.s32 0, %v1612
    %v1614 = vrot.slane %v1555, %v1613
    %v1617 = vsel %vm118, %v1606, 0
    %v1620 = vsel %vm118, %v1607, 0
    %v1623 = vsel %vm118, %v1608, 0
    %v1626 = vsel %vm118, %v1609, 0
    %1628 = vmatprep.subr.mxu0 0.0
    %1629 = vmatpush1.msra.mxu0 %v1542
    %1630 = vmatprep.subr.mxu0 0.0
    %1631 = vmatpush1.msra.mxu0 %v1543
    %1632 = vmatprep.subr.mxu0 0.0
    %1633 = vmatpush1.msra.mxu0 %v1544
    %1634 = vmatprep.subr.mxu0 0.0
    %1635 = vmatpush1.msra.mxu0 %v1545
    %1636 = vmatprep.subr.mxu0 0.0
    %1637 = vmatpush1.msra.mxu0 %v1546
    %1638 = vmatprep.subr.mxu0 0.0
    %1639 = vmatpush1.msra.mxu0 %v1547
    %1640 = vmatprep.subr.mxu0 0.0
    %1641 = vmatpush1.msra.mxu0 %v1548
    %1642 = vmatprep.subr.mxu0 0.0
    %1643 = vmatpush1.msra.mxu0 %v1549
    %1644 = vmatprep.subr.mxu0 0.0
    %1645 = vmatpush1.msra.mxu0 %v1550
    %1646 = vmatprep.subr.mxu0 0.0
    %1647 = vmatpush1.msra.mxu0 %v1551
    %1648 = vmatprep.subr.mxu0 0.0
    %1649 = vmatpush1.msra.mxu0 %v1552
    %1650 = vmatprep.subr.mxu0 0.0
    %1651 = vmatpush1.msra.mxu0 %v1553
    %1652 = vmatprep.subr.mxu0 0.0
    %1653 = vmatpush1.msra.mxu0 0.0
    %1654 = vmatprep.subr.mxu0 0.0
    %1655 = vmatpush1.msra.mxu0 0.0
    %1656 = vmatprep.subr.mxu0 0.0
    %1657 = vmatpush1.msra.mxu0 0.0
    %1658 = vmatprep.subr.mxu0 0.0
    %1659 = vmatpush1.msra.mxu0 0.0
    %1660 = vmatprep.subr.mxu0 0.0
    %1661 = vmatpush1.msra.mxu0 0.0
    %1662 = vmatprep.subr.mxu0 0.0
    %1663 = vmatpush1.msra.mxu0 0.0
    %1664 = vmatprep.subr.mxu0 0.0
    %1665 = vmatpush1.msra.mxu0 0.0
    %1666 = vmatprep.subr.mxu0 0.0
    %1667 = vmatpush1.msra.mxu0 0.0
    %1668 = vmatprep.subr.mxu0 0.0
    %1669 = vmatpush1.msra.mxu0 0.0
    %1670 = vmatprep.subr.mxu0 0.0
    %1671 = vmatpush1.msra.mxu0 0.0
    %1672 = vmatprep.subr.mxu0 0.0
    %1673 = vmatpush1.msra.mxu0 0.0
    %1674 = vmatprep.subr.mxu0 0.0
    %1675 = vmatpush1.msra.mxu0 0.0
    %1676 = vmatprep.subr.mxu0 0.0
    %1677 = vmatpush1.msra.mxu0 0.0
    %1678 = vmatprep.subr.mxu0 0.0
    %1679 = vmatpush1.msra.mxu0 0.0
    %1680 = vmatprep.subr.mxu0 0.0
    %1681 = vmatpush1.msra.mxu0 0.0
    %1682 = vmatprep.subr.mxu0 0.0
    %1683 = vmatpush1.msra.mxu0 0.0
    %1684 = vmatprep.subr.mxu0 0.0
    %1685 = vmatpush1.msra.mxu0 0.0
    %1686 = vmatprep.subr.mxu0 0.0
    %1687 = vmatpush1.msra.mxu0 0.0
    %1688 = vmatprep.subr.mxu0 0.0
    %1689 = vmatpush1.msra.mxu0 0.0
    %1690 = vmatprep.subr.mxu0 0.0
    %1691 = vmatpush1.msra.mxu0 0.0
    %1692 = vmatprep.mubr.f32.mxu0 0.0
    %1693 = vmatmul.mubr.f32.gmra.mrb[0].mxu0 %v1617
    %v1694 = vpop.f32.mrb[0].mxu0
    %v1695 = vadd.f32 %v1614, %v1694
    %v1696 = vpop.f32.mrb[0].mxu0
    %1697 = vmatprep.mubr.f32.mxu0 0.0
    %1698 = vmatmul.mubr.f32.gmra.mrb[0].mxu0 %v1620
    %v1699 = vpop.f32.mrb[0].mxu0
    %v1700 = vadd.f32 %v1614, %v1699
    %v1701 = vpop.f32.mrb[0].mxu0
    %1702 = vmatprep.mubr.f32.mxu0 0.0
    %1703 = vmatmul.mubr.f32.gmra.mrb[0].mxu0 %v1623
    %v1704 = vpop.f32.mrb[0].mxu0
    %v1705 = vadd.f32 %v1614, %v1704
    %v1706 = vpop.f32.mrb[0].mxu0
    %1707 = vmatprep.mubr.f32.mxu0 0.0
    %1708 = vmatmul.mubr.f32.gmra.mrb[0].mxu0 %v1626
    %v1709 = vpop.f32.mrb[0].mxu0
    %v1710 = vadd.f32 %v1614, %v1709
    %v1711 = vpop.f32.mrb[0].mxu0
    %1712 = vdwg.mxu0
    %s1713 = scalar_lea.vmem %s3, 3
    %v1714 = vld [vmem:[%s1713] sm:$0x1]
    %s1715 = scalar_lea.vmem %s4, 3
    %v1716 = vld [vmem:[%s1715] sm:$0x1]
    %v1717 = vsel %vm33, %v1695, 0.0
    %1718 = vadd.xlane.f32.xlu0 %v1717
    %v1719 = vpop.xlane.xlu0 %1718
    %v1720 = vsel %vm33, %v1700, 0.0
    %1721 = vadd.xlane.f32.xlu0 %v1720
    %v1722 = vpop.xlane.xlu0 %1721
    %v1723 = vsel %vm33, %v1705, 0.0
    %1724 = vadd.xlane.f32.xlu0 %v1723
    %v1725 = vpop.xlane.xlu0 %1724
    %v1726 = vsel %vm33, %v1710, 0.0
    %1727 = vadd.xlane.f32.xlu0 %v1726
    %v1728 = vpop.xlane.xlu0 %1727
    %v1729 = vmul.f32 %v1719, %v230
    %v1730 = vmul.f32 %v1722, %v230
    %v1731 = vmul.f32 %v1725, %v230
    %v1732 = vmul.f32 %v1728, %v230
    %v1733 = vsub.f32 %v1695, %v1729
    %v1734 = vsub.f32 %v1700, %v1730
    %v1735 = vsub.f32 %v1705, %v1731
    %v1736 = vsub.f32 %v1710, %v1732
    %v1737 = vmul.f32 %v1733, %v1733
    %v1738 = vmul.f32 %v1734, %v1734
    %v1739 = vmul.f32 %v1735, %v1735
    %v1740 = vmul.f32 %v1736, %v1736
    %v1741 = vsel %vm33, %v1737, 0.0
    %1742 = vadd.xlane.f32.xlu0 %v1741
    %v1743 = vpop.xlane.xlu0 %1742
    %v1744 = vsel %vm33, %v1738, 0.0
    %1745 = vadd.xlane.f32.xlu0 %v1744
    %v1746 = vpop.xlane.xlu0 %1745
    %v1747 = vsel %vm33, %v1739, 0.0
    %1748 = vadd.xlane.f32.xlu0 %v1747
    %v1749 = vpop.xlane.xlu0 %1748
    %v1750 = vsel %vm33, %v1740, 0.0
    %1751 = vadd.xlane.f32.xlu0 %v1750
    %v1752 = vpop.xlane.xlu0 %1751
    %v1753 = vmul.f32 %v1743, %v230
    %v1754 = vmul.f32 %v1746, %v230
    %v1755 = vmul.f32 %v1749, %v230
    %v1756 = vmul.f32 %v1752, %v230
    %v1757 = vadd.f32 %v1753, 1e-08
    %v1758 = vadd.f32 %v1754, 1e-08
    %v1759 = vadd.f32 %v1755, 1e-08
    %v1760 = vadd.f32 %v1756, 1e-08
    %v1761 = vrsqrt.pop %v1757
    %v1762 = vrsqrt.pop %v1758
    %v1763 = vrsqrt.pop %v1759
    %v1764 = vrsqrt.pop %v1760
    %v1765 = vmul.f32 %v1733, %v1761
    %v1766 = vmul.f32 %v1734, %v1762
    %v1767 = vmul.f32 %v1735, %v1763
    %v1768 = vmul.f32 %v1736, %v1764
    %v1770 = vlaneseq
    %v1771 = vshrl.u32 %v1770, 7
    %v1772 = vsub.s32 0, %v1771
    %v1773 = vrot.slane %v1714, %v1772
    %v1775 = vmul.f32 %v1765, %v1773
    %v1776 = vmul.f32 %v1766, %v1773
    %v1777 = vmul.f32 %v1767, %v1773
    %v1778 = vmul.f32 %v1768, %v1773
    %v1780 = vlaneseq
    %v1781 = vshrl.u32 %v1780, 7
    %v1782 = vsub.s32 0, %v1781
    %v1783 = vrot.slane %v1716, %v1782
    %v1785 = vadd.f32 %v1775, %v1783
    %v1786 = vadd.f32 %v1776, %v1783
    %v1787 = vadd.f32 %v1777, %v1783
    %v1788 = vadd.f32 %v1778, %v1783
    %v1789 = vmax.f32 %v1785, 0.0
    %v1790 = vmax.f32 %v1786, 0.0
    %v1791 = vmax.f32 %v1787, 0.0
    %v1792 = vmax.f32 %v1788, 0.0
    %s1793 = scalar_lea.vmem %s5, 288
    %v1794 = vld [vmem:[%s1793 + $0x20] sm:$0xff]
    %v1795 = vld [vmem:[%s1793 + $0x28] sm:$0xff]
    %v1796 = vld [vmem:[%s1793 + $0x30] sm:$0xff]
    %v1797 = vld [vmem:[%s1793 + $0x38] sm:$0xff]
    %v1798 = vld [vmem:[%s1793 + $0x40] sm:$0xff]
    %v1799 = vld [vmem:[%s1793 + $0x48] sm:$0xff]
    %v1800 = vld [vmem:[%s1793 + $0x50] sm:$0xff]
    %v1801 = vld [vmem:[%s1793 + $0x58] sm:$0xff]
    %s1802 = scalar_lea.vmem %s6, 3
    %v1803 = vld [vmem:[%s1802] sm:$0x1]
    %1804 = vst.msk [vmem:[#allocation2 + $0x10] sm:$0xff] %vm33, %v1789
    %1805 = vst.msk [vmem:[#allocation2 + $0x18] sm:$0xff] %vm33, %v1790
    %1806 = vst.msk [vmem:[#allocation2 + $0x30] sm:$0xff] %vm33, %v1791
    %1807 = vst.msk [vmem:[#allocation2 + $0x38] sm:$0xff] %vm33, %v1792
    %v1808 = vld [vmem:[#allocation2 + $0x8] sm:$0xff]
    %v1809 = vld [vmem:[#allocation2 + $0x10] sm:$0xff]
    %v1810 = vld [vmem:[#allocation2 + $0x28] sm:$0xff]
    %v1811 = vld [vmem:[#allocation2 + $0x30] sm:$0xff]
    %v1812 = vld [vmem:[#allocation2 + $0x18] sm:$0xff]
    %v1813 = vld [vmem:[#allocation2 + $0x38] sm:$0xff]
    %1818 = vrot.lane.b32.xlu0 %v1809, 32
    %v1819 = vpop.permute.xlu0 %1818
    %1820 = vrot.lane.b32.xlu0 %v1812, 32
    %v1821 = vpop.permute.xlu0 %1820
    %1822 = vrot.lane.b32.xlu0 %v1811, 32
    %v1823 = vpop.permute.xlu0 %1822
    %1824 = vrot.lane.b32.xlu0 %v1813, 32
    %v1825 = vpop.permute.xlu0 %1824
    %v1830 = vsel %vm33, %v1808, %v1819
    %v1831 = vsel %vm33, %v1809, %v1821
    %v1832 = vsel %vm33, %v1810, %v1823
    %v1833 = vsel %vm33, %v1811, %v1825
    %v1835 = vlaneseq
    %v1836 = vshrl.u32 %v1835, 7
    %v1837 = vsub.s32 0, %v1836
    %v1838 = vrot.slane %v1803, %v1837
    %v1841 = vsel %vm107, %v1830, 0
    %v1844 = vsel %vm107, %v1831, 0
    %v1847 = vsel %vm107, %v1832, 0
    %v1850 = vsel %vm107, %v1833, 0
    %1852 = vmatprep.subr.mxu0 0.0
    %1853 = vmatpush1.msra.mxu0 %v1794
    %1854 = vmatprep.subr.mxu0 0.0
    %1855 = vmatpush1.msra.mxu0 %v1795
    %1856 = vmatprep.subr.mxu0 0.0
    %1857 = vmatpush1.msra.mxu0 %v1796
    %1858 = vmatprep.subr.mxu0 0.0
    %1859 = vmatpush1.msra.mxu0 %v1797
    %1860 = vmatprep.subr.mxu0 0.0
    %1861 = vmatpush1.msra.mxu0 %v1798
    %1862 = vmatprep.subr.mxu0 0.0
    %1863 = vmatpush1.msra.mxu0 %v1799
    %1864 = vmatprep.subr.mxu0 0.0
    %1865 = vmatpush1.msra.mxu0 %v1800
    %1866 = vmatprep.subr.mxu0 0.0
    %1867 = vmatpush1.msra.mxu0 %v1801
    %1868 = vmatprep.subr.mxu0 0.0
    %1869 = vmatpush1.msra.mxu0 0.0
    %1870 = vmatprep.subr.mxu0 0.0
    %1871 = vmatpush1.msra.mxu0 0.0
    %1872 = vmatprep.subr.mxu0 0.0
    %1873 = vmatpush1.msra.mxu0 0.0
    %1874 = vmatprep.subr.mxu0 0.0
    %1875 = vmatpush1.msra.mxu0 0.0
    %1876 = vmatprep.subr.mxu0 0.0
    %1877 = vmatpush1.msra.mxu0 0.0
    %1878 = vmatprep.subr.mxu0 0.0
    %1879 = vmatpush1.msra.mxu0 0.0
    %1880 = vmatprep.subr.mxu0 0.0
    %1881 = vmatpush1.msra.mxu0 0.0
    %1882 = vmatprep.subr.mxu0 0.0
    %1883 = vmatpush1.msra.mxu0 0.0
    %1884 = vmatprep.subr.mxu0 0.0
    %1885 = vmatpush1.msra.mxu0 0.0
    %1886 = vmatprep.subr.mxu0 0.0
    %1887 = vmatpush1.msra.mxu0 0.0
    %1888 = vmatprep.subr.mxu0 0.0
    %1889 = vmatpush1.msra.mxu0 0.0
    %1890 = vmatprep.subr.mxu0 0.0
    %1891 = vmatpush1.msra.mxu0 0.0
    %1892 = vmatprep.subr.mxu0 0.0
    %1893 = vmatpush1.msra.mxu0 0.0
    %1894 = vmatprep.subr.mxu0 0.0
    %1895 = vmatpush1.msra.mxu0 0.0
    %1896 = vmatprep.subr.mxu0 0.0
    %1897 = vmatpush1.msra.mxu0 0.0
    %1898 = vmatprep.subr.mxu0 0.0
    %1899 = vmatpush1.msra.mxu0 0.0
    %1900 = vmatprep.subr.mxu0 0.0
    %1901 = vmatpush1.msra.mxu0 0.0
    %1902 = vmatprep.subr.mxu0 0.0
    %1903 = vmatpush1.msra.mxu0 0.0
    %1904 = vmatprep.subr.mxu0 0.0
    %1905 = vmatpush1.msra.mxu0 0.0
    %1906 = vmatprep.subr.mxu0 0.0
    %1907 = vmatpush1.msra.mxu0 0.0
    %1908 = vmatprep.subr.mxu0 0.0
    %1909 = vmatpush1.msra.mxu0 0.0
    %1910 = vmatprep.subr.mxu0 0.0
    %1911 = vmatpush1.msra.mxu0 0.0
    %1912 = vmatprep.subr.mxu0 0.0
    %1913 = vmatpush1.msra.mxu0 0.0
    %1914 = vmatprep.subr.mxu0 0.0
    %1915 = vmatpush1.msra.mxu0 0.0
    %1916 = vmatprep.mubr.f32.mxu0 0.0
    %1917 = vmatmul.mubr.f32.gmra.mrb[0].mxu0 %v1841
    %v1918 = vpop.f32.mrb[0].mxu0
    %v1919 = vadd.f32 %v1838, %v1918
    %v1920 = vpop.f32.mrb[0].mxu0
    %1921 = vmatprep.mubr.f32.mxu0 0.0
    %1922 = vmatmul.mubr.f32.gmra.mrb[0].mxu0 %v1844
    %v1923 = vpop.f32.mrb[0].mxu0
    %v1924 = vadd.f32 %v1838, %v1923
    %v1925 = vpop.f32.mrb[0].mxu0
    %1926 = vmatprep.mubr.f32.mxu0 0.0
    %1927 = vmatmul.mubr.f32.gmra.mrb[0].mxu0 %v1847
    %v1928 = vpop.f32.mrb[0].mxu0
    %v1929 = vadd.f32 %v1838, %v1928
    %v1930 = vpop.f32.mrb[0].mxu0
    %1931 = vmatprep.mubr.f32.mxu0 0.0
    %1932 = vmatmul.mubr.f32.gmra.mrb[0].mxu0 %v1850
    %v1933 = vpop.f32.mrb[0].mxu0
    %v1934 = vadd.f32 %v1838, %v1933
    %v1935 = vpop.f32.mrb[0].mxu0
    %1936 = vdwg.mxu0
    %s1937 = scalar_lea.vmem %s7, 3
    %v1938 = vld [vmem:[%s1937] sm:$0x1]
    %s1939 = scalar_lea.vmem %s8, 3
    %v1940 = vld [vmem:[%s1939] sm:$0x1]
    %v1941 = vsel %vm33, %v1919, 0.0
    %1942 = vadd.xlane.f32.xlu0 %v1941
    %v1943 = vpop.xlane.xlu0 %1942
    %v1944 = vsel %vm33, %v1924, 0.0
    %1945 = vadd.xlane.f32.xlu0 %v1944
    %v1946 = vpop.xlane.xlu0 %1945
    %v1947 = vsel %vm33, %v1929, 0.0
    %1948 = vadd.xlane.f32.xlu0 %v1947
    %v1949 = vpop.xlane.xlu0 %1948
    %v1950 = vsel %vm33, %v1934, 0.0
    %1951 = vadd.xlane.f32.xlu0 %v1950
    %v1952 = vpop.xlane.xlu0 %1951
    %v1953 = vmul.f32 %v1943, %v230
    %v1954 = vmul.f32 %v1946, %v230
    %v1955 = vmul.f32 %v1949, %v230
    %v1956 = vmul.f32 %v1952, %v230
    %v1957 = vsub.f32 %v1919, %v1953
    %v1958 = vsub.f32 %v1924, %v1954
    %v1959 = vsub.f32 %v1929, %v1955
    %v1960 = vsub.f32 %v1934, %v1956
    %v1961 = vmul.f32 %v1957, %v1957
    %v1962 = vmul.f32 %v1958, %v1958
    %v1963 = vmul.f32 %v1959, %v1959
    %v1964 = vmul.f32 %v1960, %v1960
    %v1965 = vsel %vm33, %v1961, 0.0
    %1966 = vadd.xlane.f32.xlu0 %v1965
    %v1967 = vpop.xlane.xlu0 %1966
    %v1968 = vsel %vm33, %v1962, 0.0
    %1969 = vadd.xlane.f32.xlu0 %v1968
    %v1970 = vpop.xlane.xlu0 %1969
    %v1971 = vsel %vm33, %v1963, 0.0
    %1972 = vadd.xlane.f32.xlu0 %v1971
    %v1973 = vpop.xlane.xlu0 %1972
    %v1974 = vsel %vm33, %v1964, 0.0
    %1975 = vadd.xlane.f32.xlu0 %v1974
    %v1976 = vpop.xlane.xlu0 %1975
    %v1977 = vmul.f32 %v1967, %v230
    %v1978 = vmul.f32 %v1970, %v230
    %v1979 = vmul.f32 %v1973, %v230
    %v1980 = vmul.f32 %v1976, %v230
    %v1981 = vadd.f32 %v1977, 1e-08
    %v1982 = vadd.f32 %v1978, 1e-08
    %v1983 = vadd.f32 %v1979, 1e-08
    %v1984 = vadd.f32 %v1980, 1e-08
    %v1985 = vrsqrt.pop %v1981
    %v1986 = vrsqrt.pop %v1982
    %v1987 = vrsqrt.pop %v1983
    %v1988 = vrsqrt.pop %v1984
    %v1989 = vmul.f32 %v1957, %v1985
    %v1990 = vmul.f32 %v1958, %v1986
    %v1991 = vmul.f32 %v1959, %v1987
    %v1992 = vmul.f32 %v1960, %v1988
    %v1994 = vlaneseq
    %v1995 = vshrl.u32 %v1994, 7
    %v1996 = vsub.s32 0, %v1995
    %v1997 = vrot.slane %v1938, %v1996
    %v1999 = vmul.f32 %v1989, %v1997
    %v2000 = vmul.f32 %v1990, %v1997
    %v2001 = vmul.f32 %v1991, %v1997
    %v2002 = vmul.f32 %v1992, %v1997
    %v2004 = vlaneseq
    %v2005 = vshrl.u32 %v2004, 7
    %v2006 = vsub.s32 0, %v2005
    %v2007 = vrot.slane %v1940, %v2006
    %v2009 = vadd.f32 %v1999, %v2007
    %v2010 = vadd.f32 %v2000, %v2007
    %v2011 = vadd.f32 %v2001, %v2007
    %v2012 = vadd.f32 %v2002, %v2007
    %v2013 = vmax.f32 %v2009, 0.0
    %v2014 = vmax.f32 %v2010, 0.0
    %v2015 = vmax.f32 %v2011, 0.0
    %v2016 = vmax.f32 %v2012, 0.0
    %v2017 = vadd.f32 %v2013, %v1537
    %v2018 = vadd.f32 %v2014, %v1538
    %v2019 = vadd.f32 %v2015, %v1539
    %v2020 = vadd.f32 %v2016, %v1540
    %2021 = vst.msk [vmem:[#allocation3] sm:$0xff] %vm33, %v2017
    %2022 = vst.msk [vmem:[#allocation3 + $0x8] sm:$0xff] %vm33, %v2018
    %2023 = vst.msk [vmem:[#allocation3 + $0x10] sm:$0xff] %vm33, %v2019
    %2024 = vst.msk [vmem:[#allocation3 + $0x18] sm:$0xff] %vm33, %v2020
    // Predicated region
    $region38: #{tpu_custom_call.1} parent=1 // pred_check
      _
    $region39: #{tpu_custom_call.1} parent=1 // pred_check_branch
      %2026 = sbr.rel (0) target = $region41
    $region40: #{tpu_custom_call.1} parent=1 // pred_region
      %s2028 = ssub.s32 512, 512
      %2029 = vsyncadd [#allocation4], %s2028
      %s2030 = sshll.u32 [#allocation3], 4
      %s2031 = int_to_ptr.vmem [resolvable:$true] %s2030
      %2036 = dma.vmem_to_hbm [thread:$0]  %s2031, 512, %s9, [#allocation4], 128, 128, 8
    $region41: #{tpu_custom_call.1} parent=1 // pred_fallthru
      _
    // Predicated region
    $region42: #{tpu_custom_call.1} parent=1 // pred_check
      _
    $region43: #{tpu_custom_call.1} parent=1 // pred_check_branch
      %2038 = sbr.rel (0) target = $region45
    $region44: #{tpu_custom_call.1} parent=1 // pred_region
      %2039 = dma.done [#allocation4], 512
    $region45: #{tpu_custom_call.1} parent=1 // pred_fallthru
      _
    %2040 = vsyncpa [#allocation4], 1

</llo_original>
